<compile_context>
chip_gen: v7x
topology: tpu7x:2x2x1
jax: 0.10.0
libtpu: 0.0.40
codegen_flags: <defaults>
</compile_context>

<pallas_src>
import math

import jax
import jax.numpy as jnp
from jax.experimental import pallas as pl
from jax.experimental.pallas import tpu as pltpu


_MASK_VALUE = -1e30  # finite "minus infinity": avoids exp(-inf - (-inf)) = NaN


def _pick_tile(dim, candidates):
    """Largest candidate that evenly divides `dim`, else the full dim."""
    for c in candidates:
        if c <= dim and dim % c == 0:
            return c
    return dim


# ---------------------------------------------------------------------------
# Tiled linear: y = x @ w + b
# ---------------------------------------------------------------------------

def _linear_kernel(x_ref, w_ref, b_ref, o_ref, acc_ref):
    kk = pl.program_id(2)

    @pl.when(kk == 0)
    def _init():
        acc_ref[...] = jnp.zeros_like(acc_ref)

    acc_ref[...] += jnp.dot(x_ref[...], w_ref[...],
                            preferred_element_type=jnp.float32)

    @pl.when(kk == pl.num_programs(2) - 1)
    def _finalize():
        o_ref[...] = (acc_ref[...] + b_ref[...]).astype(o_ref.dtype)


def linear(x, w, b):
    """y = x @ w + b, tiled over (M, N, K) with a f32 accumulator.

    x: (M, K), w: (K, N), b: (1, N) -> (M, N)
    """
    M, K = x.shape
    K2, N = w.shape
    assert K == K2 and b.shape == (1, N)

    # 256-aligned tiles fill the v6e/v7x 2x256^2 MXU; they also divide cleanly
    # into 128-multiples for v5e. Fall back to the full dim for tiny shapes.
    tm = _pick_tile(M, (256, 128, 8))
    tn = _pick_tile(N, (256, 128))
    tk = _pick_tile(K, (512, 256, 128))
    grid = (M // tm, N // tn, K // tk)

    itemsize = jnp.dtype(x.dtype).itemsize
    cost = pl.CostEstimate(
        flops=int(2 * M * K * N),
        transcendentals=0,
        bytes_accessed=int((M * K + K * N + N + M * N) * itemsize),
    )

    return pl.pallas_call(
        _linear_kernel,
        out_shape=jax.ShapeDtypeStruct((M, N), x.dtype),
        grid=grid,
        in_specs=[
            pl.BlockSpec((tm, tk), lambda i, j, kk: (i, kk)),
            pl.BlockSpec((tk, tn), lambda i, j, kk: (kk, j)),
            pl.BlockSpec((1, tn), lambda i, j, kk: (0, j)),
        ],
        out_specs=pl.BlockSpec((tm, tn), lambda i, j, kk: (i, j)),
        scratch_shapes=[pltpu.VMEM((tm, tn), jnp.float32)],
        compiler_params=pltpu.CompilerParams(
            dimension_semantics=("parallel", "parallel", "arbitrary")),
        cost_estimate=cost,
    )(x, w, b)


# ---------------------------------------------------------------------------
# Flash-attention (causal)
# ---------------------------------------------------------------------------

def _flash_attention_kernel(q_ref, k_ref, v_ref, o_ref, m_sc, l_sc, acc_sc):
    # q_ref: (1, 1, tq, D), k_ref/v_ref: (1, 1, tk, D), o_ref: (1, 1, tq, D)
    _, _, tq, d = q_ref.shape
    _, _, tk, _ = k_ref.shape
    qi = pl.program_id(2)
    ki = pl.program_id(3)
    scale = 1.0 / math.sqrt(d)

    @pl.when(ki == 0)
    def _init():
        m_sc[...] = jnp.full_like(m_sc, _MASK_VALUE)
        l_sc[...] = jnp.zeros_like(l_sc)
        acc_sc[...] = jnp.zeros_like(acc_sc)

    first_q_row = qi * tq
    last_q_row = first_q_row + (tq - 1)
    first_k_col = ki * tk
    last_k_col = first_k_col + (tk - 1)

    def attend(apply_mask):
        # Fold 1/sqrt(D) into q: (tq, D) multiplies instead of (tq, tk).
        q = q_ref[0, 0] * scale
        k = k_ref[0, 0]
        v = v_ref[0, 0]
        # q @ k^T on the MXU (contract last dims, no materialized transpose).
        s = jax.lax.dot_general(q, k, (((1,), (1,)), ((), ())),
                                preferred_element_type=jnp.float32)  # (tq, tk)
        if apply_mask:  # only diagonal tiles pay for the iota mask
            rows = jax.lax.broadcasted_iota(jnp.int32, (tq, tk), 0) + first_q_row
            cols = jax.lax.broadcasted_iota(jnp.int32, (tq, tk), 1) + first_k_col
            s = jnp.where(cols <= rows, s, _MASK_VALUE)

        m_prev = m_sc[...]
        m_new = jnp.maximum(m_prev, jnp.max(s, axis=-1, keepdims=True))
        alpha = jnp.exp(m_prev - m_new)
        p = jnp.exp(s - m_new)
        l_sc[...] = alpha * l_sc[...] + jnp.sum(p, axis=-1, keepdims=True)
        acc_sc[...] = alpha * acc_sc[...] + jnp.dot(
            p.astype(v.dtype), v, preferred_element_type=jnp.float32)
        m_sc[...] = m_new

    # Causal tile classification (kv tiles with first_k_col > last_q_row are
    # fully masked and skipped: no MXU/VPU work at all).
    fully_visible = last_k_col <= first_q_row
    diagonal = jnp.logical_and(first_k_col <= last_q_row,
                               jnp.logical_not(fully_visible))

    @pl.when(fully_visible)
    def _unmasked():
        attend(apply_mask=False)

    @pl.when(diagonal)
    def _masked():
        attend(apply_mask=True)

    @pl.when(ki == pl.num_programs(3) - 1)
    def _finalize():
        # Normalize the (tq, D) output, not the (tq, tk) scores. Approx
        # reciprocal (EUP) + one Newton step recovers full f32 accuracy.
        l = l_sc[...]
        inv_l = pl.reciprocal(l, approx=True)
        inv_l = inv_l * (2.0 - l * inv_l)
        o_ref[0, 0] = (acc_sc[...] * inv_l).astype(o_ref.dtype)


def causal_attention(q, k, v, *, block_q=128, block_k=128):
    """q, k, v: (B, H, T, D) -> (B, H, T, D), causal softmax attention."""
    B, H, T, D = q.shape
    tq = _pick_tile(T, (block_q,))
    tk = _pick_tile(T, (block_k,))
    grid = (B, H, T // tq, T // tk)

    q_spec = pl.BlockSpec((1, 1, tq, D), lambda b, h, qi, ki: (b, h, qi, 0))
    kv_spec = pl.BlockSpec((1, 1, tk, D), lambda b, h, qi, ki: (b, h, ki, 0))
    o_spec = pl.BlockSpec((1, 1, tq, D), lambda b, h, qi, ki: (b, h, qi, 0))

    itemsize = jnp.dtype(q.dtype).itemsize
    cost = pl.CostEstimate(
        flops=int(2 * B * H * T * T * D),          # 2 matmuls, ~half kept (causal)
        transcendentals=int(B * H * T * T // 2),   # exp on surviving tiles
        bytes_accessed=int(4 * B * H * T * D * itemsize),
    )

    return pl.pallas_call(
        _flash_attention_kernel,
        out_shape=jax.ShapeDtypeStruct((B, H, T, D), q.dtype),
        grid=grid,
        in_specs=[q_spec, kv_spec, kv_spec],
        out_specs=o_spec,
        scratch_shapes=[
            pltpu.VMEM((tq, 1), jnp.float32),   # running max m
            pltpu.VMEM((tq, 1), jnp.float32),   # running denom l
            pltpu.VMEM((tq, D), jnp.float32),   # output accumulator
        ],
        compiler_params=pltpu.CompilerParams(
            dimension_semantics=("parallel", "parallel", "parallel", "arbitrary")),
        cost_estimate=cost,
    )(q, k, v)


# ---------------------------------------------------------------------------
# Module wrapper (head split/merge in plain JAX)
# ---------------------------------------------------------------------------
# TODO(synk): fuse the head split/merge into the attention BlockSpecs (index
# q/k/v straight out of the (B, T, 3C) qkv buffer) to remove the XLA
# transpose round-trips between pallas_calls.

def causal_self_attention(x, params, n_head):
    """Equivalent of CausalSelfAttention.forward.

    x: (B, T, C)
    params: w_attn (C, 3C), b_attn (1, 3C), w_proj (C, C), b_proj (1, C)
            (weights already transposed from PyTorch's (out, in) layout)
    """
    B, T, C = x.shape
    D = C // n_head

    qkv = linear(x.reshape(B * T, C), params["w_attn"], params["b_attn"])
    qkv = qkv.reshape(B, T, 3, n_head, D)
    q = qkv[:, :, 0].transpose(0, 2, 1, 3)   # (B, H, T, D)
    k = qkv[:, :, 1].transpose(0, 2, 1, 3)
    v = qkv[:, :, 2].transpose(0, 2, 1, 3)

    y = causal_attention(q, k, v)                    # (B, H, T, D)
    y = y.transpose(0, 2, 1, 3).reshape(B * T, C)    # merge heads

    y = linear(y, params["w_proj"], params["b_proj"])
    return y.reshape(B, T, C)


def reference(x, params, n_head):
    """Pure-JAX reference (highest precision) for a sanity check."""
    B, T, C = x.shape
    D = C // n_head
    hp = jax.lax.Precision.HIGHEST
    qkv = jnp.dot(x.reshape(B * T, C), params["w_attn"], precision=hp) + params["b_attn"]
    qkv = qkv.reshape(B, T, 3, n_head, D)
    q = qkv[:, :, 0].transpose(0, 2, 1, 3)
    k = qkv[:, :, 1].transpose(0, 2, 1, 3)
    v = qkv[:, :, 2].transpose(0, 2, 1, 3)
    s = jnp.einsum("bhqd,bhkd->bhqk", q, k, precision=hp) / math.sqrt(D)
    mask = jnp.tril(jnp.ones((T, T), dtype=bool))
    s = jnp.where(mask, s, -jnp.inf)
    p = jax.nn.softmax(s, axis=-1)
    y = jnp.einsum("bhqk,bhkd->bhqd", p, v, precision=hp)
    y = y.transpose(0, 2, 1, 3).reshape(B * T, C)
    y = jnp.dot(y, params["w_proj"], precision=hp) + params["b_proj"]
    return y.reshape(B, T, C)


if __name__ == "__main__":
    # Small shapes consistent with the module: (B, T, C), n_head | C.
    # T=256 with 128-tiles exercises multi-tile flash attention and causal
    # skipping; D=128 keeps the attention output lane-dense.
    B, T, C, n_head = 2, 256, 256, 2

    key = jax.random.PRNGKey(0)
    kx, k1, k2, k3, k4 = jax.random.split(key, 5)

    x = jax.random.normal(kx, (B, T, C), dtype=jnp.float32)

    # nn.Linear(C, 3C) weight is (3C, C) in PyTorch; stored transposed here.
    bound = 1.0 / math.sqrt(C)
    params = {
        "w_attn": jax.random.uniform(k1, (C, 3 * C), jnp.float32, -bound, bound),
        "b_attn": jax.random.uniform(k2, (1, 3 * C), jnp.float32, -bound, bound),
        "w_proj": jax.random.uniform(k3, (C, C), jnp.float32, -bound, bound),
        "b_proj": jax.random.uniform(k4, (1, C), jnp.float32, -bound, bound),
    }

    y = causal_self_attention(x, params, n_head)
    y = jax.block_until_ready(y)

    y_ref = reference(x, params, n_head)
    assert y.shape == (B, T, C)
    err = jnp.max(jnp.abs(y - y_ref))
    assert jnp.allclose(y, y_ref, atol=2e-3, rtol=2e-3), f"mismatch vs reference, max |err| = {err}"

    print("KERNEL_OK")
</pallas_src>

<mosaic_0001>
module attributes {stable_mosaic.version = 11 : i64} {
  func.func @_linear_kernel(%arg0: i32, %arg1: i32, %arg2: i32, %arg3: memref<256x256xf32, #tpu.memory_space<vmem>>, %arg4: memref<256x256xf32, #tpu.memory_space<vmem>>, %arg5: memref<1x256xf32, #tpu.memory_space<vmem>>, %arg6: memref<256x256xf32, #tpu.memory_space<vmem>>, %arg7: memref<256x256xf32, #tpu.memory_space<vmem>>) attributes {dimension_semantics = [#tpu.dimension_semantics<parallel>, #tpu.dimension_semantics<parallel>, #tpu.dimension_semantics<arbitrary>], iteration_bounds = array<i64: 2, 3, 1>, scalar_prefetch = 0 : i64, scratch_operands = 1 : i64, tpu.core_type = #tpu.core_type<tc>, window_params = [{transform_indices = @transform_0, window_bounds = array<i64: 256, 256>}, {transform_indices = @transform_1, window_bounds = array<i64: 256, 256>}, {transform_indices = @transform_2, window_bounds = array<i64: 1, 256>}, {transform_indices = @transform_3, window_bounds = array<i64: 256, 256>}]} {
    %c0_i32 = arith.constant 0 : i32
    %0 = arith.cmpi eq, %arg2, %c0_i32 : i32
    %1 = arith.extui %0 : i1 to i32
    %c0_i32_0 = arith.constant 0 : i32
    %2 = arith.cmpi ne, %1, %c0_i32_0 : i32
    scf.if %2 {
      %cst_10 = arith.constant 0.000000e+00 : f32
      %12 = vector.broadcast %cst_10 : f32 to vector<256x256xf32>
      %c0_11 = arith.constant 0 : index
      %c0_12 = arith.constant 0 : index
      %13 = vector.load %arg7[%c0_11, %c0_12] : memref<256x256xf32, #tpu.memory_space<vmem>>, vector<256x256xf32>
      tpu.vector_store %arg7[%c0_11, %c0_12], %12 {strides = array<i32>} : memref<256x256xf32, #tpu.memory_space<vmem>>, vector<256x256xf32>,
    } else {
    }
    %c0 = arith.constant 0 : index
    %c0_1 = arith.constant 0 : index
    %3 = vector.load %arg7[%c0, %c0_1] : memref<256x256xf32, #tpu.memory_space<vmem>>, vector<256x256xf32>
    %c0_2 = arith.constant 0 : index
    %c0_3 = arith.constant 0 : index
    %4 = vector.load %arg3[%c0_2, %c0_3] : memref<256x256xf32, #tpu.memory_space<vmem>>, vector<256x256xf32>
    %c0_4 = arith.constant 0 : index
    %c0_5 = arith.constant 0 : index
    %5 = vector.load %arg4[%c0_4, %c0_5] : memref<256x256xf32, #tpu.memory_space<vmem>>, vector<256x256xf32>
    %cst = arith.constant dense<0.000000e+00> : vector<256x256xf32>
    %6 = tpu.matmul %4, %5, %cst {dimension_numbers = #tpu.dot_dimension_numbers<[1], [0], [0], [1], [0, 0, 1, 1], [], []>} : vector<256x256xf32>, vector<256x256xf32>, vector<256x256xf32> -> vector<256x256xf32>
    %7 = arith.addf %3, %6 : vector<256x256xf32>
    %c0_6 = arith.constant 0 : index
    %c0_7 = arith.constant 0 : index
    %8 = vector.load %arg7[%c0_6, %c0_7] : memref<256x256xf32, #tpu.memory_space<vmem>>, vector<256x256xf32>
    tpu.vector_store %arg7[%c0_6, %c0_7], %7 {strides = array<i32>} : memref<256x256xf32, #tpu.memory_space<vmem>>, vector<256x256xf32>,
    %c0_i32_8 = arith.constant 0 : i32
    %9 = arith.cmpi eq, %arg2, %c0_i32_8 : i32
    %10 = arith.extui %9 : i1 to i32
    %c0_i32_9 = arith.constant 0 : i32
    %11 = arith.cmpi ne, %10, %c0_i32_9 : i32
    scf.if %11 {
      %c0_10 = arith.constant 0 : index
      %c0_11 = arith.constant 0 : index
      %12 = vector.load %arg7[%c0_10, %c0_11] : memref<256x256xf32, #tpu.memory_space<vmem>>, vector<256x256xf32>
      %c0_12 = arith.constant 0 : index
      %c0_13 = arith.constant 0 : index
      %13 = vector.load %arg5[%c0_12, %c0_13] : memref<1x256xf32, #tpu.memory_space<vmem>>, vector<1x256xf32>
      %14 = vector.broadcast %13 : vector<1x256xf32> to vector<256x256xf32>
      %15 = arith.addf %12, %14 : vector<256x256xf32>
      %c0_14 = arith.constant 0 : index
      %c0_15 = arith.constant 0 : index
      %16 = vector.load %arg6[%c0_14, %c0_15] : memref<256x256xf32, #tpu.memory_space<vmem>>, vector<256x256xf32>
      tpu.vector_store %arg6[%c0_14, %c0_15], %15 {strides = array<i32>} : memref<256x256xf32, #tpu.memory_space<vmem>>, vector<256x256xf32>,
    } else {
    }
    return
  }
  func.func @transform_0(%arg0: i32, %arg1: i32, %arg2: i32) -> (i32, i32) {
    %c0_i32 = arith.constant 0 : i32
    return %arg0, %arg2 : i32, i32
  }
  func.func @transform_1(%arg0: i32, %arg1: i32, %arg2: i32) -> (i32, i32) {
    %c0_i32 = arith.constant 0 : i32
    return %arg2, %arg1 : i32, i32
  }
  func.func @transform_2(%arg0: i32, %arg1: i32, %arg2: i32) -> (i32, i32) {
    %c0_i32 = arith.constant 0 : i32
    %c0_i32_0 = arith.constant 0 : i32
    return %c0_i32, %arg1 : i32, i32
  }
  func.func @transform_3(%arg0: i32, %arg1: i32, %arg2: i32) -> (i32, i32) {
    %c0_i32 = arith.constant 0 : i32
    return %arg0, %arg1 : i32, i32
  }
}

</mosaic_0001>

<llo_original>
// kernel: tpu_custom_call.1
$region0: #{tpu_custom_call.1}
  #allocation0 [shape = 'u32[]', space=smem, size = 0x4, offset = 0x4, fixed_abs, tag = 'smem constant byte address 0x4 - core index']
  #allocation1 [shape = 'u32[144,128]{1,0:T(1,128)}', space=vmem, size = 0x12000, scoped, tag = 'internal scratch']
  #allocation2 [shape = 'f32[256,256]{1,0:T(8,128)}', space=vmem, size = 0x40000, scoped, tag = 'scratch operand']
  %s0 = inlined_call_operand.hbm [shape: f32[512,256], index: 0, kind: input, shape index: {}]
  %s1 = inlined_call_operand.hbm [shape: f32[256,768], index: 1, kind: input, shape index: {}]
  %s2 = inlined_call_operand.hbm [shape: f32[1,768], index: 2, kind: input, shape index: {}]
  %s3 = inlined_call_operand.hbm [shape: f32[512,768], index: 3, kind: output, shape index: {}]
  %s4 = sld [smem:[#allocation0]]
  $region65: #{tpu_custom_call.1} parent=0
    _
  %s6 = ssub.s32 1, %s4
  %s7 = scalar_select 0, %s6, %s4
  $region1: #{tpu_custom_call.1} parent=0
    #allocation3 [shape = 'u8[524288]{0}', space=vmem, size = 0x80000, scoped, tag = 'input window, operand 0']
    #allocation4 [shape = 's32[2]{0}', space=sflag, size = 0x8, scoped, tag = 'scoped memory for tpu_custom_call.1']
    #allocation5 [shape = 's32[2]{0}', space=sflag, size = 0x8, scoped, tag = 'scoped memory for tpu_custom_call.1']
    #allocation6 [shape = 'u8[524288]{0}', space=vmem, size = 0x80000, scoped, tag = 'input window, operand 1']
    #allocation7 [shape = 's32[2]{0}', space=sflag, size = 0x8, scoped, tag = 'scoped memory for tpu_custom_call.1']
    #allocation8 [shape = 'u8[2048]{0}', space=vmem, size = 0x800, scoped, tag = 'input window, operand 2']
    #allocation9 [shape = 'u8[524288]{0}', space=vmem, size = 0x80000, scoped, tag = 'output window, operand 0']
    %8 = vsyncpa [#allocation4], 0
    %s9 = scalar_lea.sflag [#allocation4], 1
    %10 = vsyncpa %s9, 0
    %11 = vsyncpa [#allocation7], 0
    %s12 = scalar_lea.sflag [#allocation7], 1
    %13 = vsyncpa %s12, 0
    %14 = vsyncpa [#allocation5], 0
    %s15 = scalar_lea.sflag [#allocation5], 1
    %16 = vsyncpa %s15, 0
    loop: start=0, step=1, limit=8
    $region2: #{tpu_custom_call.1} parent=1 // loop_pre_header
      _
    $region3: #{tpu_custom_call.1} parent=1 // loop_header
      %s18 = sphi 0, %s22
      %p19 = scmp.ge.s32.totalorder %s18, 8
      %s25 = sphi 0, %s44
      %s26 = sphi 0, %s40
      %s27 = sphi 0, %s36
      %s28 = sphi 0, %s25
      %s29 = sphi 0, %s26
      %s30 = sphi 0, %s27
      %s31 = sphi 0, %s28
      %s32 = sphi 0, %s29
      %s33 = sphi 0, %s30
      %s49 = sphi 0, %s51
      %s52 = sphi 0, %s49
      %s53 = sphi 0, %s52
      %s69 = sphi 0, %s53
      %s77 = sphi 0, %s79
      %s80 = sphi 0, %s77
      %s81 = sphi 0, %s80
      %s97 = sphi 0, %s81
      %s103 = sphi 0, %s105
      %s106 = sphi 0, %s103
      %s107 = sphi 0, %s106
      %s123 = sphi 0, %s107
      %s131 = sphi 0, %s133
      %s134 = sphi 0, %s131
      %s135 = sphi 0, %s134
      %s151 = sphi 0, %s135
    $region4: #{tpu_custom_call.1} parent=1 // loop_header_branch
      %21 = sbr.rel (%p19) target = $region8
    $region5: #{tpu_custom_call.1} parent=1 // loop_body
      %s23 = ssub.s32 %s18, 1
      %s24 = ssub.s32 %s18, 2
      %s34 = sadd.s32 1, %s27
      %p35 = scmp.ge.s32.totalorder %s34, 1
      %s36 = scalar_select %p35, 0, %s34
      %s37 = sadd.s32 1, %s26
      %s38 = scalar_select %p35, %s37, %s26
      %p39 = scmp.ge.s32.totalorder %s38, 3
      %s40 = scalar_select %p39, 0, %s38
      %s41 = sadd.s32 1, %s25
      %s42 = scalar_select %p39, %s41, %s25
      %p43 = scmp.ge.s32.totalorder %s42, 2
      %s44 = scalar_select %p43, 0, %s42
      %s45 = ssub.s32 %s25, %s44
      %s46 = ssub.s32 %s27, %s36
      %s47 = sor.u32 %s45, %s46
      %p48 = scmp.eq.s32.totalorder %s47, 0
      %s50 = sadd.s32 %s49, 1
      %s51 = scalar_select %p48, %s49, %s50
      %p54 = pneg %p48
      %p55 = scmp.eq.s32.totalorder %s18, 5
      %p56 = por %p54, %p55
      %p57 = scmp.ne.s32.totalorder %s49, %s52
      %p58 = scmp.eq.s32.totalorder %s18, 0
      %p59 = por %p57, %p58
      %p60 = scmp.ne.s32.totalorder %s49, %s52
      %p61 = scmp.eq.s32.totalorder %s23, 5
      %p62 = por %p60, %p61
      %p63 = scmp.ne.s32.totalorder %s52, %s53
      %p64 = scmp.eq.s32.totalorder %s23, 0
      %p65 = por %p63, %p64
      %p66 = scmp.ne.s32.totalorder %s52, %s53
      %p67 = scmp.eq.s32.totalorder %s24, 5
      %p68 = por %p66, %p67
      %p70 = scmp.ne.s32.totalorder %s53, %s69
      %p71 = scmp.eq.s32.totalorder %s24, 0
      %p72 = por %p70, %p71
      %s73 = ssub.s32 %s27, %s36
      %s74 = ssub.s32 %s26, %s40
      %s75 = sor.u32 %s73, %s74
      %p76 = scmp.eq.s32.totalorder %s75, 0
      %s78 = sadd.s32 %s77, 1
      %s79 = scalar_select %p76, %s77, %s78
      %p82 = pneg %p76
      %p83 = scmp.eq.s32.totalorder %s18, 5
      %p84 = por %p82, %p83
      %p85 = scmp.ne.s32.totalorder %s77, %s80
      %p86 = scmp.eq.s32.totalorder %s18, 0
      %p87 = por %p85, %p86
      %p88 = scmp.ne.s32.totalorder %s77, %s80
      %p89 = scmp.eq.s32.totalorder %s23, 5
      %p90 = por %p88, %p89
      %p91 = scmp.ne.s32.totalorder %s80, %s81
      %p92 = scmp.eq.s32.totalorder %s23, 0
      %p93 = por %p91, %p92
      %p94 = scmp.ne.s32.totalorder %s80, %s81
      %p95 = scmp.eq.s32.totalorder %s24, 5
      %p96 = por %p94, %p95
      %p98 = scmp.ne.s32.totalorder %s81, %s97
      %p99 = scmp.eq.s32.totalorder %s24, 0
      %p100 = por %p98, %p99
      %s101 = ssub.s32 %s26, %s40
      %p102 = scmp.eq.s32.totalorder %s101, 0
      %s104 = sadd.s32 %s103, 1
      %s105 = scalar_select %p102, %s103, %s104
      %p108 = pneg %p102
      %p109 = scmp.eq.s32.totalorder %s18, 5
      %p110 = por %p108, %p109
      %p111 = scmp.ne.s32.totalorder %s103, %s106
      %p112 = scmp.eq.s32.totalorder %s18, 0
      %p113 = por %p111, %p112
      %p114 = scmp.ne.s32.totalorder %s103, %s106
      %p115 = scmp.eq.s32.totalorder %s23, 5
      %p116 = por %p114, %p115
      %p117 = scmp.ne.s32.totalorder %s106, %s107
      %p118 = scmp.eq.s32.totalorder %s23, 0
      %p119 = por %p117, %p118
      %p120 = scmp.ne.s32.totalorder %s106, %s107
      %p121 = scmp.eq.s32.totalorder %s24, 5
      %p122 = por %p120, %p121
      %p124 = scmp.ne.s32.totalorder %s107, %s123
      %p125 = scmp.eq.s32.totalorder %s24, 0
      %p126 = por %p124, %p125
      %s127 = ssub.s32 %s25, %s44
      %s128 = ssub.s32 %s26, %s40
      %s129 = sor.u32 %s127, %s128
      %p130 = scmp.eq.s32.totalorder %s129, 0
      %s132 = sadd.s32 %s131, 1
      %s133 = scalar_select %p130, %s131, %s132
      %p136 = pneg %p130
      %p137 = scmp.eq.s32.totalorder %s18, 5
      %p138 = por %p136, %p137
      %p139 = scmp.ne.s32.totalorder %s131, %s134
      %p140 = scmp.eq.s32.totalorder %s18, 0
      %p141 = por %p139, %p140
      %p142 = scmp.ne.s32.totalorder %s131, %s134
      %p143 = scmp.eq.s32.totalorder %s23, 5
      %p144 = por %p142, %p143
      %p145 = scmp.ne.s32.totalorder %s134, %s135
      %p146 = scmp.eq.s32.totalorder %s23, 0
      %p147 = por %p145, %p146
      %p148 = scmp.ne.s32.totalorder %s134, %s135
      %p149 = scmp.eq.s32.totalorder %s24, 5
      %p150 = por %p148, %p149
      %p152 = scmp.ne.s32.totalorder %s135, %s151
      %p153 = scmp.eq.s32.totalorder %s24, 0
      %p154 = por %p152, %p153
      %p155 = scmp.le.s32.totalorder 1, %s18
      %p156 = scmp.lt.s32.totalorder %s18, 7
      %p157 = pnand %p155, %p156
      %p158 = pneg %p157
      // Predicated region
      $region9: #{tpu_custom_call.1} parent=5 // pred_check
        _
      $region10: #{tpu_custom_call.1} parent=5 // pred_check_branch
        %160 = sbr.rel (%p157) target = $region12
      $region11: #{tpu_custom_call.1} parent=5 // pred_region
        %s161 = ssub.s32 %s18, 1
      $region12: #{tpu_custom_call.1} parent=5 // pred_fallthru
        _
      %p162 = scmp.lt.s32.totalorder %s18, 6
      // Predicated region
      $region13: #{tpu_custom_call.1} parent=5 // pred_check
        %p163 = pneg %p162
      $region14: #{tpu_custom_call.1} parent=5 // pred_check_branch
        %165 = sbr.rel (%p163) target = $region16
      $region15: #{tpu_custom_call.1} parent=5 // pred_region
        // Predicated region
        $region17: #{tpu_custom_call.1} parent=15 // pred_check
          %p166 = pneg %p59
        $region18: #{tpu_custom_call.1} parent=15 // pred_check_branch
          %168 = sbr.rel (%p166) target = $region20
        $region19: #{tpu_custom_call.1} parent=15 // pred_region
          %s169 = sand.u32 %s49, 1
          %s170 = scalar_lea.sflag [#allocation4], %s169
          %s171 = sand.u32 %s49, 1
          %s172 = smul.addr %s171, 512
          %s173 = scalar_lea.vmem [#allocation3], %s172
          %s174 = smul.u32 32, %s25
          %s175 = smul.u32 2, %s27
          %s177 = ssub.s32 8192, 8192
          %178 = vsyncadd %s170, %s177
          %s179 = smul.addr %s174, 2
          %s180 = sadd.s32 %s175, %s179
          %s181 = smul.addr %s180, 128
          %s182 = scalar_lea.hbm %s0, %s181
          %s183 = sshll.u32 %s173, 4
          %s184 = int_to_ptr.vmem [resolvable:$true] %s183
          %189 = dma.hbm_to_vmem [thread:$0]  %s182, 8192, %s184, %s170, 256, 256, 16
        $region20: #{tpu_custom_call.1} parent=15 // pred_fallthru
          _
        // Predicated region
        $region21: #{tpu_custom_call.1} parent=15 // pred_check
          %p190 = pneg %p87
        $region22: #{tpu_custom_call.1} parent=15 // pred_check_branch
          %192 = sbr.rel (%p190) target = $region24
        $region23: #{tpu_custom_call.1} parent=15 // pred_region
          %s193 = sand.u32 %s18, 1
          %s194 = scalar_lea.sflag [#allocation7], %s193
          %s195 = sand.u32 %s77, 1
          %s196 = smul.addr %s195, 512
          %s197 = scalar_lea.vmem [#allocation6], %s196
          %s198 = smul.u32 32, %s27
          %s199 = smul.u32 2, %s26
          %s201 = ssub.s32 8192, 8192
          %202 = vsyncadd %s194, %s201
          %s203 = smul.addr %s198, 6
          %s204 = sadd.s32 %s199, %s203
          %s205 = smul.addr %s204, 128
          %s206 = scalar_lea.hbm %s1, %s205
          %s207 = sshll.u32 %s197, 4
          %s208 = int_to_ptr.vmem [resolvable:$true] %s207
          %213 = dma.hbm_to_vmem [thread:$0]  %s206, 8192, %s208, %s194, 768, 256, 16
        $region24: #{tpu_custom_call.1} parent=15 // pred_fallthru
          _
        // Predicated region
        $region25: #{tpu_custom_call.1} parent=15 // pred_check
          %p214 = pneg %p113
        $region26: #{tpu_custom_call.1} parent=15 // pred_check_branch
          %216 = sbr.rel (%p214) target = $region28
        $region27: #{tpu_custom_call.1} parent=15 // pred_region
          %s217 = sand.u32 %s18, 1
          %s218 = scalar_lea.sflag [#allocation7], %s217
          %s219 = sand.u32 %s103, 1
          %s220 = smul.addr %s219, 2
          %s221 = scalar_lea.vmem [#allocation8], %s220
          %s222 = smul.u32 2, %s26
          %s224 = ssub.s32 32, 32
          %225 = vsyncadd %s218, %s224
          %s226 = smul.addr %s222, 16
          %s227 = scalar_lea.hbm %s2, %s226
          %s229 = sshll.u32 %s221, 4
          %s230 = int_to_ptr.vmem [resolvable:$true] %s229
          %232 = dma.hbm_to_vmem [thread:$0]  %s227, 32, %s230, %s218
        $region28: #{tpu_custom_call.1} parent=15 // pred_fallthru
          _
      $region16: #{tpu_custom_call.1} parent=5 // pred_fallthru
        _
      %p233 = scmp.le.s32.totalorder 1, %s18
      %p234 = scmp.lt.s32.totalorder %s18, 7
      %p235 = pnand %p233, %p234
      %p236 = pneg %p235
      // Predicated region
      $region29: #{tpu_custom_call.1} parent=5 // pred_check
        _
      $region30: #{tpu_custom_call.1} parent=5 // pred_check_branch
        %238 = sbr.rel (%p235) target = $region32
      $region31: #{tpu_custom_call.1} parent=5 // pred_region
        %s239 = ssub.s32 %s18, 1
        %s240 = sand.u32 %s52, 1
        %s241 = scalar_lea.sflag [#allocation4], %s240
        %s242 = sand.u32 %s52, 1
        %s243 = smul.addr %s242, 512
        %s244 = scalar_lea.vmem [#allocation3], %s243
        // Predicated region
        $region33: #{tpu_custom_call.1} parent=31 // pred_check
          %p245 = pneg %p65
        $region34: #{tpu_custom_call.1} parent=31 // pred_check_branch
          %247 = sbr.rel (%p245) target = $region36
        $region35: #{tpu_custom_call.1} parent=31 // pred_region
          %248 = dma.done %s241, 8192
        $region36: #{tpu_custom_call.1} parent=31 // pred_fallthru
          _
        %s249 = sand.u32 %s23, 1
        %s250 = scalar_lea.sflag [#allocation7], %s249
        %s251 = sand.u32 %s80, 1
        %s252 = smul.addr %s251, 512
        %s253 = scalar_lea.vmem [#allocation6], %s252
        // Predicated region
        $region37: #{tpu_custom_call.1} parent=31 // pred_check
          %p254 = pneg %p93
        $region38: #{tpu_custom_call.1} parent=31 // pred_check_branch
          %256 = sbr.rel (%p254) target = $region40
        $region39: #{tpu_custom_call.1} parent=31 // pred_region
          %257 = dma.done %s250, 8192
        $region40: #{tpu_custom_call.1} parent=31 // pred_fallthru
          _
        %s258 = sand.u32 %s23, 1
        %s259 = scalar_lea.sflag [#allocation7], %s258
        %s260 = sand.u32 %s106, 1
        %s261 = smul.addr %s260, 2
        %s262 = scalar_lea.vmem [#allocation8], %s261
        // Predicated region
        $region41: #{tpu_custom_call.1} parent=31 // pred_check
          %p263 = pneg %p119
        $region42: #{tpu_custom_call.1} parent=31 // pred_check_branch
          %265 = sbr.rel (%p263) target = $region44
        $region43: #{tpu_custom_call.1} parent=31 // pred_region
          %266 = dma.done %s259, 32
        $region44: #{tpu_custom_call.1} parent=31 // pred_fallthru
          _
        %s267 = sand.u32 %s52, 1
        %s268 = scalar_lea.sflag [#allocation4], %s267
        %s269 = sand.u32 %s52, 1
        %s270 = smul.addr %s269, 512
        %s271 = scalar_lea.vmem [#allocation3], %s270
        %p272 = pneg %p65
        %p273 = pneg %p62
        %s274 = sand.u32 %s23, 1
        %s275 = scalar_lea.sflag [#allocation7], %s274
        %s276 = sand.u32 %s80, 1
        %s277 = smul.addr %s276, 512
        %s278 = scalar_lea.vmem [#allocation6], %s277
        %p279 = pneg %p93
        %p280 = pneg %p90
        %s281 = sand.u32 %s23, 1
        %s282 = scalar_lea.sflag [#allocation7], %s281
        %s283 = sand.u32 %s106, 1
        %s284 = smul.addr %s283, 2
        %s285 = scalar_lea.vmem [#allocation8], %s284
        %p286 = pneg %p119
        %p287 = pneg %p116
        %p288 = pneg %p147
        %p289 = pneg %p144
        %s290 = sand.u32 %s134, 1
        %s291 = scalar_lea.sflag [#allocation5], %s290
        %s292 = sand.u32 %s134, 1
        %s293 = smul.addr %s292, 512
        %s294 = scalar_lea.vmem [#allocation9], %s293
        %s295 = smul.u32 32, %s28
        %s296 = smul.u32 2, %s30
        %s297 = smul.u32 32, %s30
        %s298 = smul.u32 2, %s29
        %s299 = smul.u32 2, %s29
        %s300 = smul.u32 32, %s28
        %s301 = smul.u32 2, %s29
        %p302 = scmp.eq.s32.totalorder %s30, 0
        // Predicated region
        $region45: #{tpu_custom_call.1} parent=31 // pred_check
          %p303 = pneg %p302
        $region46: #{tpu_custom_call.1} parent=31 // pred_check_branch
          %305 = sbr.rel (%p303) target = $region48
        $region47: #{tpu_custom_call.1} parent=31 // pred_region
          %306 = vst [vmem:[#allocation2] sm:$0xff] 0.0
          %307 = vst [vmem:[#allocation2 + $0x8] sm:$0xff] 0.0
          %308 = vst [vmem:[#allocation2 + $0x10] sm:$0xff] 0.0
          %309 = vst [vmem:[#allocation2 + $0x18] sm:$0xff] 0.0
          %310 = vst [vmem:[#allocation2 + $0x20] sm:$0xff] 0.0
          %311 = vst [vmem:[#allocation2 + $0x28] sm:$0xff] 0.0
          %312 = vst [vmem:[#allocation2 + $0x30] sm:$0xff] 0.0
          %313 = vst [vmem:[#allocation2 + $0x38] sm:$0xff] 0.0
          %314 = vst [vmem:[#allocation2 + $0x40] sm:$0xff] 0.0
          %315 = vst [vmem:[#allocation2 + $0x48] sm:$0xff] 0.0
          %316 = vst [vmem:[#allocation2 + $0x50] sm:$0xff] 0.0
          %317 = vst [vmem:[#allocation2 + $0x58] sm:$0xff] 0.0
          %318 = vst [vmem:[#allocation2 + $0x60] sm:$0xff] 0.0
          %319 = vst [vmem:[#allocation2 + $0x68] sm:$0xff] 0.0
          %320 = vst [vmem:[#allocation2 + $0x70] sm:$0xff] 0.0
          %321 = vst [vmem:[#allocation2 + $0x78] sm:$0xff] 0.0
          %322 = vst [vmem:[#allocation2 + $0x80] sm:$0xff] 0.0
          %323 = vst [vmem:[#allocation2 + $0x88] sm:$0xff] 0.0
          %324 = vst [vmem:[#allocation2 + $0x90] sm:$0xff] 0.0
          %325 = vst [vmem:[#allocation2 + $0x98] sm:$0xff] 0.0
          %326 = vst [vmem:[#allocation2 + $0xa0] sm:$0xff] 0.0
          %327 = vst [vmem:[#allocation2 + $0xa8] sm:$0xff] 0.0
          %328 = vst [vmem:[#allocation2 + $0xb0] sm:$0xff] 0.0
          %329 = vst [vmem:[#allocation2 + $0xb8] sm:$0xff] 0.0
          %330 = vst [vmem:[#allocation2 + $0xc0] sm:$0xff] 0.0
          %331 = vst [vmem:[#allocation2 + $0xc8] sm:$0xff] 0.0
          %332 = vst [vmem:[#allocation2 + $0xd0] sm:$0xff] 0.0
          %333 = vst [vmem:[#allocation2 + $0xd8] sm:$0xff] 0.0
          %334 = vst [vmem:[#allocation2 + $0xe0] sm:$0xff] 0.0
          %335 = vst [vmem:[#allocation2 + $0xe8] sm:$0xff] 0.0
          %336 = vst [vmem:[#allocation2 + $0xf0] sm:$0xff] 0.0
          %337 = vst [vmem:[#allocation2 + $0xf8] sm:$0xff] 0.0
          %338 = vst [vmem:[#allocation2 + $0x100] sm:$0xff] 0.0
          %339 = vst [vmem:[#allocation2 + $0x108] sm:$0xff] 0.0
          %340 = vst [vmem:[#allocation2 + $0x110] sm:$0xff] 0.0
          %341 = vst [vmem:[#allocation2 + $0x118] sm:$0xff] 0.0
          %342 = vst [vmem:[#allocation2 + $0x120] sm:$0xff] 0.0
          %343 = vst [vmem:[#allocation2 + $0x128] sm:$0xff] 0.0
          %344 = vst [vmem:[#allocation2 + $0x130] sm:$0xff] 0.0
          %345 = vst [vmem:[#allocation2 + $0x138] sm:$0xff] 0.0
          %346 = vst [vmem:[#allocation2 + $0x140] sm:$0xff] 0.0
          %347 = vst [vmem:[#allocation2 + $0x148] sm:$0xff] 0.0
          %348 = vst [vmem:[#allocation2 + $0x150] sm:$0xff] 0.0
          %349 = vst [vmem:[#allocation2 + $0x158] sm:$0xff] 0.0
          %350 = vst [vmem:[#allocation2 + $0x160] sm:$0xff] 0.0
          %351 = vst [vmem:[#allocation2 + $0x168] sm:$0xff] 0.0
          %352 = vst [vmem:[#allocation2 + $0x170] sm:$0xff] 0.0
          %353 = vst [vmem:[#allocation2 + $0x178] sm:$0xff] 0.0
          %354 = vst [vmem:[#allocation2 + $0x180] sm:$0xff] 0.0
          %355 = vst [vmem:[#allocation2 + $0x188] sm:$0xff] 0.0
          %356 = vst [vmem:[#allocation2 + $0x190] sm:$0xff] 0.0
          %357 = vst [vmem:[#allocation2 + $0x198] sm:$0xff] 0.0
          %358 = vst [vmem:[#allocation2 + $0x1a0] sm:$0xff] 0.0
          %359 = vst [vmem:[#allocation2 + $0x1a8] sm:$0xff] 0.0
          %360 = vst [vmem:[#allocation2 + $0x1b0] sm:$0xff] 0.0
          %361 = vst [vmem:[#allocation2 + $0x1b8] sm:$0xff] 0.0
          %362 = vst [vmem:[#allocation2 + $0x1c0] sm:$0xff] 0.0
          %363 = vst [vmem:[#allocation2 + $0x1c8] sm:$0xff] 0.0
          %364 = vst [vmem:[#allocation2 + $0x1d0] sm:$0xff] 0.0
          %365 = vst [vmem:[#allocation2 + $0x1d8] sm:$0xff] 0.0
          %366 = vst [vmem:[#allocation2 + $0x1e0] sm:$0xff] 0.0
          %367 = vst [vmem:[#allocation2 + $0x1e8] sm:$0xff] 0.0
          %368 = vst [vmem:[#allocation2 + $0x1f0] sm:$0xff] 0.0
          %369 = vst [vmem:[#allocation2 + $0x1f8] sm:$0xff] 0.0
        $region48: #{tpu_custom_call.1} parent=31 // pred_fallthru
          _
        %v370 = vld [vmem:[#allocation2] sm:$0xff]
        %v371 = vld [vmem:[#allocation2 + $0x8] sm:$0xff]
        %v372 = vld [vmem:[#allocation2 + $0x10] sm:$0xff]
        %v373 = vld [vmem:[#allocation2 + $0x18] sm:$0xff]
        %v374 = vld [vmem:[#allocation2 + $0x20] sm:$0xff]
        %v375 = vld [vmem:[#allocation2 + $0x28] sm:$0xff]
        %v376 = vld [vmem:[#allocation2 + $0x30] sm:$0xff]
        %v377 = vld [vmem:[#allocation2 + $0x38] sm:$0xff]
        %v378 = vld [vmem:[#allocation2 + $0x40] sm:$0xff]
        %v379 = vld [vmem:[#allocation2 + $0x48] sm:$0xff]
        %v380 = vld [vmem:[#allocation2 + $0x50] sm:$0xff]
        %v381 = vld [vmem:[#allocation2 + $0x58] sm:$0xff]
        %v382 = vld [vmem:[#allocation2 + $0x60] sm:$0xff]
        %v383 = vld [vmem:[#allocation2 + $0x68] sm:$0xff]
        %v384 = vld [vmem:[#allocation2 + $0x70] sm:$0xff]
        %v385 = vld [vmem:[#allocation2 + $0x78] sm:$0xff]
        %v386 = vld [vmem:[#allocation2 + $0x80] sm:$0xff]
        %v387 = vld [vmem:[#allocation2 + $0x88] sm:$0xff]
        %v388 = vld [vmem:[#allocation2 + $0x90] sm:$0xff]
        %v389 = vld [vmem:[#allocation2 + $0x98] sm:$0xff]
        %v390 = vld [vmem:[#allocation2 + $0xa0] sm:$0xff]
        %v391 = vld [vmem:[#allocation2 + $0xa8] sm:$0xff]
        %v392 = vld [vmem:[#allocation2 + $0xb0] sm:$0xff]
        %v393 = vld [vmem:[#allocation2 + $0xb8] sm:$0xff]
        %v394 = vld [vmem:[#allocation2 + $0xc0] sm:$0xff]
        %v395 = vld [vmem:[#allocation2 + $0xc8] sm:$0xff]
        %v396 = vld [vmem:[#allocation2 + $0xd0] sm:$0xff]
        %v397 = vld [vmem:[#allocation2 + $0xd8] sm:$0xff]
        %v398 = vld [vmem:[#allocation2 + $0xe0] sm:$0xff]
        %v399 = vld [vmem:[#allocation2 + $0xe8] sm:$0xff]
        %v400 = vld [vmem:[#allocation2 + $0xf0] sm:$0xff]
        %v401 = vld [vmem:[#allocation2 + $0xf8] sm:$0xff]
        %v402 = vld [vmem:[#allocation2 + $0x100] sm:$0xff]
        %v403 = vld [vmem:[#allocation2 + $0x108] sm:$0xff]
        %v404 = vld [vmem:[#allocation2 + $0x110] sm:$0xff]
        %v405 = vld [vmem:[#allocation2 + $0x118] sm:$0xff]
        %v406 = vld [vmem:[#allocation2 + $0x120] sm:$0xff]
        %v407 = vld [vmem:[#allocation2 + $0x128] sm:$0xff]
        %v408 = vld [vmem:[#allocation2 + $0x130] sm:$0xff]
        %v409 = vld [vmem:[#allocation2 + $0x138] sm:$0xff]
        %v410 = vld [vmem:[#allocation2 + $0x140] sm:$0xff]
        %v411 = vld [vmem:[#allocation2 + $0x148] sm:$0xff]
        %v412 = vld [vmem:[#allocation2 + $0x150] sm:$0xff]
        %v413 = vld [vmem:[#allocation2 + $0x158] sm:$0xff]
        %v414 = vld [vmem:[#allocation2 + $0x160] sm:$0xff]
        %v415 = vld [vmem:[#allocation2 + $0x168] sm:$0xff]
        %v416 = vld [vmem:[#allocation2 + $0x170] sm:$0xff]
        %v417 = vld [vmem:[#allocation2 + $0x178] sm:$0xff]
        %v418 = vld [vmem:[#allocation2 + $0x180] sm:$0xff]
        %v419 = vld [vmem:[#allocation2 + $0x188] sm:$0xff]
        %v420 = vld [vmem:[#allocation2 + $0x190] sm:$0xff]
        %v421 = vld [vmem:[#allocation2 + $0x198] sm:$0xff]
        %v422 = vld [vmem:[#allocation2 + $0x1a0] sm:$0xff]
        %v423 = vld [vmem:[#allocation2 + $0x1a8] sm:$0xff]
        %v424 = vld [vmem:[#allocation2 + $0x1b0] sm:$0xff]
        %v425 = vld [vmem:[#allocation2 + $0x1b8] sm:$0xff]
        %v426 = vld [vmem:[#allocation2 + $0x1c0] sm:$0xff]
        %v427 = vld [vmem:[#allocation2 + $0x1c8] sm:$0xff]
        %v428 = vld [vmem:[#allocation2 + $0x1d0] sm:$0xff]
        %v429 = vld [vmem:[#allocation2 + $0x1d8] sm:$0xff]
        %v430 = vld [vmem:[#allocation2 + $0x1e0] sm:$0xff]
        %v431 = vld [vmem:[#allocation2 + $0x1e8] sm:$0xff]
        %v432 = vld [vmem:[#allocation2 + $0x1f0] sm:$0xff]
        %v433 = vld [vmem:[#allocation2 + $0x1f8] sm:$0xff]
        %v434 = vld [vmem:[%s244] sm:$0xff]
        %v435 = vld [vmem:[%s244 + $0x8] sm:$0xff]
        %v436 = vld [vmem:[%s244 + $0x10] sm:$0xff]
        %v437 = vld [vmem:[%s244 + $0x18] sm:$0xff]
        %v438 = vld [vmem:[%s244 + $0x20] sm:$0xff]
        %v439 = vld [vmem:[%s244 + $0x28] sm:$0xff]
        %v440 = vld [vmem:[%s244 + $0x30] sm:$0xff]
        %v441 = vld [vmem:[%s244 + $0x38] sm:$0xff]
        %v442 = vld [vmem:[%s244 + $0x40] sm:$0xff]
        %v443 = vld [vmem:[%s244 + $0x48] sm:$0xff]
        %v444 = vld [vmem:[%s244 + $0x50] sm:$0xff]
        %v445 = vld [vmem:[%s244 + $0x58] sm:$0xff]
        %v446 = vld [vmem:[%s244 + $0x60] sm:$0xff]
        %v447 = vld [vmem:[%s244 + $0x68] sm:$0xff]
        %v448 = vld [vmem:[%s244 + $0x70] sm:$0xff]
        %v449 = vld [vmem:[%s244 + $0x78] sm:$0xff]
        %v450 = vld [vmem:[%s244 + $0x80] sm:$0xff]
        %v451 = vld [vmem:[%s244 + $0x88] sm:$0xff]
        %v452 = vld [vmem:[%s244 + $0x90] sm:$0xff]
        %v453 = vld [vmem:[%s244 + $0x98] sm:$0xff]
        %v454 = vld [vmem:[%s244 + $0xa0] sm:$0xff]
        %v455 = vld [vmem:[%s244 + $0xa8] sm:$0xff]
        %v456 = vld [vmem:[%s244 + $0xb0] sm:$0xff]
        %v457 = vld [vmem:[%s244 + $0xb8] sm:$0xff]
        %v458 = vld [vmem:[%s244 + $0xc0] sm:$0xff]
        %v459 = vld [vmem:[%s244 + $0xc8] sm:$0xff]
        %v460 = vld [vmem:[%s244 + $0xd0] sm:$0xff]
        %v461 = vld [vmem:[%s244 + $0xd8] sm:$0xff]
        %v462 = vld [vmem:[%s244 + $0xe0] sm:$0xff]
        %v463 = vld [vmem:[%s244 + $0xe8] sm:$0xff]
        %v464 = vld [vmem:[%s244 + $0xf0] sm:$0xff]
        %v465 = vld [vmem:[%s244 + $0xf8] sm:$0xff]
        %v466 = vld [vmem:[%s244 + $0x100] sm:$0xff]
        %v467 = vld [vmem:[%s244 + $0x108] sm:$0xff]
        %v468 = vld [vmem:[%s244 + $0x110] sm:$0xff]
        %v469 = vld [vmem:[%s244 + $0x118] sm:$0xff]
        %v470 = vld [vmem:[%s244 + $0x120] sm:$0xff]
        %v471 = vld [vmem:[%s244 + $0x128] sm:$0xff]
        %v472 = vld [vmem:[%s244 + $0x130] sm:$0xff]
        %v473 = vld [vmem:[%s244 + $0x138] sm:$0xff]
        %v474 = vld [vmem:[%s244 + $0x140] sm:$0xff]
        %v475 = vld [vmem:[%s244 + $0x148] sm:$0xff]
        %v476 = vld [vmem:[%s244 + $0x150] sm:$0xff]
        %v477 = vld [vmem:[%s244 + $0x158] sm:$0xff]
        %v478 = vld [vmem:[%s244 + $0x160] sm:$0xff]
        %v479 = vld [vmem:[%s244 + $0x168] sm:$0xff]
        %v480 = vld [vmem:[%s244 + $0x170] sm:$0xff]
        %v481 = vld [vmem:[%s244 + $0x178] sm:$0xff]
        %v482 = vld [vmem:[%s244 + $0x180] sm:$0xff]
        %v483 = vld [vmem:[%s244 + $0x188] sm:$0xff]
        %v484 = vld [vmem:[%s244 + $0x190] sm:$0xff]
        %v485 = vld [vmem:[%s244 + $0x198] sm:$0xff]
        %v486 = vld [vmem:[%s244 + $0x1a0] sm:$0xff]
        %v487 = vld [vmem:[%s244 + $0x1a8] sm:$0xff]
        %v488 = vld [vmem:[%s244 + $0x1b0] sm:$0xff]
        %v489 = vld [vmem:[%s244 + $0x1b8] sm:$0xff]
        %v490 = vld [vmem:[%s244 + $0x1c0] sm:$0xff]
        %v491 = vld [vmem:[%s244 + $0x1c8] sm:$0xff]
        %v492 = vld [vmem:[%s244 + $0x1d0] sm:$0xff]
        %v493 = vld [vmem:[%s244 + $0x1d8] sm:$0xff]
        %v494 = vld [vmem:[%s244 + $0x1e0] sm:$0xff]
        %v495 = vld [vmem:[%s244 + $0x1e8] sm:$0xff]
        %v496 = vld [vmem:[%s244 + $0x1f0] sm:$0xff]
        %v497 = vld [vmem:[%s244 + $0x1f8] sm:$0xff]
        %v498 = vld [vmem:[%s253] sm:$0xff]
        %v499 = vld [vmem:[%s253 + $0x8] sm:$0xff]
        %v500 = vld [vmem:[%s253 + $0x10] sm:$0xff]
        %v501 = vld [vmem:[%s253 + $0x18] sm:$0xff]
        %v502 = vld [vmem:[%s253 + $0x20] sm:$0xff]
        %v503 = vld [vmem:[%s253 + $0x28] sm:$0xff]
        %v504 = vld [vmem:[%s253 + $0x30] sm:$0xff]
        %v505 = vld [vmem:[%s253 + $0x38] sm:$0xff]
        %v506 = vld [vmem:[%s253 + $0x40] sm:$0xff]
        %v507 = vld [vmem:[%s253 + $0x48] sm:$0xff]
        %v508 = vld [vmem:[%s253 + $0x50] sm:$0xff]
        %v509 = vld [vmem:[%s253 + $0x58] sm:$0xff]
        %v510 = vld [vmem:[%s253 + $0x60] sm:$0xff]
        %v511 = vld [vmem:[%s253 + $0x68] sm:$0xff]
        %v512 = vld [vmem:[%s253 + $0x70] sm:$0xff]
        %v513 = vld [vmem:[%s253 + $0x78] sm:$0xff]
        %v514 = vld [vmem:[%s253 + $0x80] sm:$0xff]
        %v515 = vld [vmem:[%s253 + $0x88] sm:$0xff]
        %v516 = vld [vmem:[%s253 + $0x90] sm:$0xff]
        %v517 = vld [vmem:[%s253 + $0x98] sm:$0xff]
        %v518 = vld [vmem:[%s253 + $0xa0] sm:$0xff]
        %v519 = vld [vmem:[%s253 + $0xa8] sm:$0xff]
        %v520 = vld [vmem:[%s253 + $0xb0] sm:$0xff]
        %v521 = vld [vmem:[%s253 + $0xb8] sm:$0xff]
        %v522 = vld [vmem:[%s253 + $0xc0] sm:$0xff]
        %v523 = vld [vmem:[%s253 + $0xc8] sm:$0xff]
        %v524 = vld [vmem:[%s253 + $0xd0] sm:$0xff]
        %v525 = vld [vmem:[%s253 + $0xd8] sm:$0xff]
        %v526 = vld [vmem:[%s253 + $0xe0] sm:$0xff]
        %v527 = vld [vmem:[%s253 + $0xe8] sm:$0xff]
        %v528 = vld [vmem:[%s253 + $0xf0] sm:$0xff]
        %v529 = vld [vmem:[%s253 + $0xf8] sm:$0xff]
        %v530 = vld [vmem:[%s253 + $0x100] sm:$0xff]
        %v531 = vld [vmem:[%s253 + $0x108] sm:$0xff]
        %v532 = vld [vmem:[%s253 + $0x110] sm:$0xff]
        %v533 = vld [vmem:[%s253 + $0x118] sm:$0xff]
        %v534 = vld [vmem:[%s253 + $0x120] sm:$0xff]
        %v535 = vld [vmem:[%s253 + $0x128] sm:$0xff]
        %v536 = vld [vmem:[%s253 + $0x130] sm:$0xff]
        %v537 = vld [vmem:[%s253 + $0x138] sm:$0xff]
        %v538 = vld [vmem:[%s253 + $0x140] sm:$0xff]
        %v539 = vld [vmem:[%s253 + $0x148] sm:$0xff]
        %v540 = vld [vmem:[%s253 + $0x150] sm:$0xff]
        %v541 = vld [vmem:[%s253 + $0x158] sm:$0xff]
        %v542 = vld [vmem:[%s253 + $0x160] sm:$0xff]
        %v543 = vld [vmem:[%s253 + $0x168] sm:$0xff]
        %v544 = vld [vmem:[%s253 + $0x170] sm:$0xff]
        %v545 = vld [vmem:[%s253 + $0x178] sm:$0xff]
        %v546 = vld [vmem:[%s253 + $0x180] sm:$0xff]
        %v547 = vld [vmem:[%s253 + $0x188] sm:$0xff]
        %v548 = vld [vmem:[%s253 + $0x190] sm:$0xff]
        %v549 = vld [vmem:[%s253 + $0x198] sm:$0xff]
        %v550 = vld [vmem:[%s253 + $0x1a0] sm:$0xff]
        %v551 = vld [vmem:[%s253 + $0x1a8] sm:$0xff]
        %v552 = vld [vmem:[%s253 + $0x1b0] sm:$0xff]
        %v553 = vld [vmem:[%s253 + $0x1b8] sm:$0xff]
        %v554 = vld [vmem:[%s253 + $0x1c0] sm:$0xff]
        %v555 = vld [vmem:[%s253 + $0x1c8] sm:$0xff]
        %v556 = vld [vmem:[%s253 + $0x1d0] sm:$0xff]
        %v557 = vld [vmem:[%s253 + $0x1d8] sm:$0xff]
        %v558 = vld [vmem:[%s253 + $0x1e0] sm:$0xff]
        %v559 = vld [vmem:[%s253 + $0x1e8] sm:$0xff]
        %v560 = vld [vmem:[%s253 + $0x1f0] sm:$0xff]
        %v561 = vld [vmem:[%s253 + $0x1f8] sm:$0xff]
        %562 = vmatprep.subr.mxu0 %v499
        %563 = vmatpush1.msra.mxu0 %v498
        %564 = vmatprep.subr.mxu0 %v501
        %565 = vmatpush1.msra.mxu0 %v500
        %566 = vmatprep.subr.mxu0 %v503
        %567 = vmatpush1.msra.mxu0 %v502
        %568 = vmatprep.subr.mxu0 %v505
        %569 = vmatpush1.msra.mxu0 %v504
        %570 = vmatprep.subr.mxu0 %v507
        %571 = vmatpush1.msra.mxu0 %v506
        %572 = vmatprep.subr.mxu0 %v509
        %573 = vmatpush1.msra.mxu0 %v508
        %574 = vmatprep.subr.mxu0 %v511
        %575 = vmatpush1.msra.mxu0 %v510
        %576 = vmatprep.subr.mxu0 %v513
        %577 = vmatpush1.msra.mxu0 %v512
        %578 = vmatprep.subr.mxu0 %v515
        %579 = vmatpush1.msra.mxu0 %v514
        %580 = vmatprep.subr.mxu0 %v517
        %581 = vmatpush1.msra.mxu0 %v516
        %582 = vmatprep.subr.mxu0 %v519
        %583 = vmatpush1.msra.mxu0 %v518
        %584 = vmatprep.subr.mxu0 %v521
        %585 = vmatpush1.msra.mxu0 %v520
        %586 = vmatprep.subr.mxu0 %v523
        %587 = vmatpush1.msra.mxu0 %v522
        %588 = vmatprep.subr.mxu0 %v525
        %589 = vmatpush1.msra.mxu0 %v524
        %590 = vmatprep.subr.mxu0 %v527
        %591 = vmatpush1.msra.mxu0 %v526
        %592 = vmatprep.subr.mxu0 %v529
        %593 = vmatpush1.msra.mxu0 %v528
        %594 = vmatprep.subr.mxu0 %v531
        %595 = vmatpush1.msra.mxu0 %v530
        %596 = vmatprep.subr.mxu0 %v533
        %597 = vmatpush1.msra.mxu0 %v532
        %598 = vmatprep.subr.mxu0 %v535
        %599 = vmatpush1.msra.mxu0 %v534
        %600 = vmatprep.subr.mxu0 %v537
        %601 = vmatpush1.msra.mxu0 %v536
        %602 = vmatprep.subr.mxu0 %v539
        %603 = vmatpush1.msra.mxu0 %v538
        %604 = vmatprep.subr.mxu0 %v541
        %605 = vmatpush1.msra.mxu0 %v540
        %606 = vmatprep.subr.mxu0 %v543
        %607 = vmatpush1.msra.mxu0 %v542
        %608 = vmatprep.subr.mxu0 %v545
        %609 = vmatpush1.msra.mxu0 %v544
        %610 = vmatprep.subr.mxu0 %v547
        %611 = vmatpush1.msra.mxu0 %v546
        %612 = vmatprep.subr.mxu0 %v549
        %613 = vmatpush1.msra.mxu0 %v548
        %614 = vmatprep.subr.mxu0 %v551
        %615 = vmatpush1.msra.mxu0 %v550
        %616 = vmatprep.subr.mxu0 %v553
        %617 = vmatpush1.msra.mxu0 %v552
        %618 = vmatprep.subr.mxu0 %v555
        %619 = vmatpush1.msra.mxu0 %v554
        %620 = vmatprep.subr.mxu0 %v557
        %621 = vmatpush1.msra.mxu0 %v556
        %622 = vmatprep.subr.mxu0 %v559
        %623 = vmatpush1.msra.mxu0 %v558
        %624 = vmatprep.subr.mxu0 %v561
        %625 = vmatpush1.msra.mxu0 %v560
        %626 = vmatprep.mubr.f32.mxu0 %v435
        %627 = vmatmul.mubr.f32.gmra.mrb[0].mxu0 %v434
        %v628 = vpop.f32.mrb[0].mxu0
        %v629 = vadd.f32 0.0, %v628
        %v630 = vpop.f32.mrb[0].mxu0
        %v631 = vadd.f32 0.0, %v630
        %632 = vmatprep.mubr.f32.mxu0 %v437
        %633 = vmatmul.mubr.f32.gmra.mrb[0].mxu0 %v436
        %v634 = vpop.f32.mrb[0].mxu0
        %v635 = vadd.f32 0.0, %v634
        %v636 = vpop.f32.mrb[0].mxu0
        %v637 = vadd.f32 0.0, %v636
        %638 = vmatprep.mubr.f32.mxu0 %v439
        %639 = vmatmul.mubr.f32.gmra.mrb[0].mxu0 %v438
        %v640 = vpop.f32.mrb[0].mxu0
        %v641 = vadd.f32 0.0, %v640
        %v642 = vpop.f32.mrb[0].mxu0
        %v643 = vadd.f32 0.0, %v642
        %644 = vmatprep.mubr.f32.mxu0 %v441
        %645 = vmatmul.mubr.f32.gmra.mrb[0].mxu0 %v440
        %v646 = vpop.f32.mrb[0].mxu0
        %v647 = vadd.f32 0.0, %v646
        %v648 = vpop.f32.mrb[0].mxu0
        %v649 = vadd.f32 0.0, %v648
        %650 = vmatprep.mubr.f32.mxu0 %v443
        %651 = vmatmul.mubr.f32.gmra.mrb[0].mxu0 %v442
        %v652 = vpop.f32.mrb[0].mxu0
        %v653 = vadd.f32 0.0, %v652
        %v654 = vpop.f32.mrb[0].mxu0
        %v655 = vadd.f32 0.0, %v654
        %656 = vmatprep.mubr.f32.mxu0 %v445
        %657 = vmatmul.mubr.f32.gmra.mrb[0].mxu0 %v444
        %v658 = vpop.f32.mrb[0].mxu0
        %v659 = vadd.f32 0.0, %v658
        %v660 = vpop.f32.mrb[0].mxu0
        %v661 = vadd.f32 0.0, %v660
        %662 = vmatprep.mubr.f32.mxu0 %v447
        %663 = vmatmul.mubr.f32.gmra.mrb[0].mxu0 %v446
        %v664 = vpop.f32.mrb[0].mxu0
        %v665 = vadd.f32 0.0, %v664
        %v666 = vpop.f32.mrb[0].mxu0
        %v667 = vadd.f32 0.0, %v666
        %668 = vmatprep.mubr.f32.mxu0 %v449
        %669 = vmatmul.mubr.f32.gmra.mrb[0].mxu0 %v448
        %v670 = vpop.f32.mrb[0].mxu0
        %v671 = vadd.f32 0.0, %v670
        %v672 = vpop.f32.mrb[0].mxu0
        %v673 = vadd.f32 0.0, %v672
        %674 = vmatprep.mubr.f32.mxu0 %v451
        %675 = vmatmul.mubr.f32.gmra.mrb[0].mxu0 %v450
        %v676 = vpop.f32.mrb[0].mxu0
        %v677 = vadd.f32 0.0, %v676
        %v678 = vpop.f32.mrb[0].mxu0
        %v679 = vadd.f32 0.0, %v678
        %680 = vmatprep.mubr.f32.mxu0 %v453
        %681 = vmatmul.mubr.f32.gmra.mrb[0].mxu0 %v452
        %v682 = vpop.f32.mrb[0].mxu0
        %v683 = vadd.f32 0.0, %v682
        %v684 = vpop.f32.mrb[0].mxu0
        %v685 = vadd.f32 0.0, %v684
        %686 = vmatprep.mubr.f32.mxu0 %v455
        %687 = vmatmul.mubr.f32.gmra.mrb[0].mxu0 %v454
        %v688 = vpop.f32.mrb[0].mxu0
        %v689 = vadd.f32 0.0, %v688
        %v690 = vpop.f32.mrb[0].mxu0
        %v691 = vadd.f32 0.0, %v690
        %692 = vmatprep.mubr.f32.mxu0 %v457
        %693 = vmatmul.mubr.f32.gmra.mrb[0].mxu0 %v456
        %v694 = vpop.f32.mrb[0].mxu0
        %v695 = vadd.f32 0.0, %v694
        %v696 = vpop.f32.mrb[0].mxu0
        %v697 = vadd.f32 0.0, %v696
        %698 = vmatprep.mubr.f32.mxu0 %v459
        %699 = vmatmul.mubr.f32.gmra.mrb[0].mxu0 %v458
        %v700 = vpop.f32.mrb[0].mxu0
        %v701 = vadd.f32 0.0, %v700
        %v702 = vpop.f32.mrb[0].mxu0
        %v703 = vadd.f32 0.0, %v702
        %704 = vmatprep.mubr.f32.mxu0 %v461
        %705 = vmatmul.mubr.f32.gmra.mrb[0].mxu0 %v460
        %v706 = vpop.f32.mrb[0].mxu0
        %v707 = vadd.f32 0.0, %v706
        %v708 = vpop.f32.mrb[0].mxu0
        %v709 = vadd.f32 0.0, %v708
        %710 = vmatprep.mubr.f32.mxu0 %v463
        %711 = vmatmul.mubr.f32.gmra.mrb[0].mxu0 %v462
        %v712 = vpop.f32.mrb[0].mxu0
        %v713 = vadd.f32 0.0, %v712
        %v714 = vpop.f32.mrb[0].mxu0
        %v715 = vadd.f32 0.0, %v714
        %716 = vmatprep.mubr.f32.mxu0 %v465
        %717 = vmatmul.mubr.f32.gmra.mrb[0].mxu0 %v464
        %v718 = vpop.f32.mrb[0].mxu0
        %v719 = vadd.f32 0.0, %v718
        %v720 = vpop.f32.mrb[0].mxu0
        %v721 = vadd.f32 0.0, %v720
        %722 = vmatprep.mubr.f32.mxu0 %v467
        %723 = vmatmul.mubr.f32.gmra.mrb[0].mxu0 %v466
        %v724 = vpop.f32.mrb[0].mxu0
        %v725 = vadd.f32 0.0, %v724
        %v726 = vpop.f32.mrb[0].mxu0
        %v727 = vadd.f32 0.0, %v726
        %728 = vmatprep.mubr.f32.mxu0 %v469
        %729 = vmatmul.mubr.f32.gmra.mrb[0].mxu0 %v468
        %v730 = vpop.f32.mrb[0].mxu0
        %v731 = vadd.f32 0.0, %v730
        %v732 = vpop.f32.mrb[0].mxu0
        %v733 = vadd.f32 0.0, %v732
        %734 = vmatprep.mubr.f32.mxu0 %v471
        %735 = vmatmul.mubr.f32.gmra.mrb[0].mxu0 %v470
        %v736 = vpop.f32.mrb[0].mxu0
        %v737 = vadd.f32 0.0, %v736
        %v738 = vpop.f32.mrb[0].mxu0
        %v739 = vadd.f32 0.0, %v738
        %740 = vmatprep.mubr.f32.mxu0 %v473
        %741 = vmatmul.mubr.f32.gmra.mrb[0].mxu0 %v472
        %v742 = vpop.f32.mrb[0].mxu0
        %v743 = vadd.f32 0.0, %v742
        %v744 = vpop.f32.mrb[0].mxu0
        %v745 = vadd.f32 0.0, %v744
        %746 = vmatprep.mubr.f32.mxu0 %v475
        %747 = vmatmul.mubr.f32.gmra.mrb[0].mxu0 %v474
        %v748 = vpop.f32.mrb[0].mxu0
        %v749 = vadd.f32 0.0, %v748
        %v750 = vpop.f32.mrb[0].mxu0
        %v751 = vadd.f32 0.0, %v750
        %752 = vmatprep.mubr.f32.mxu0 %v477
        %753 = vmatmul.mubr.f32.gmra.mrb[0].mxu0 %v476
        %v754 = vpop.f32.mrb[0].mxu0
        %v755 = vadd.f32 0.0, %v754
        %v756 = vpop.f32.mrb[0].mxu0
        %v757 = vadd.f32 0.0, %v756
        %758 = vmatprep.mubr.f32.mxu0 %v479
        %759 = vmatmul.mubr.f32.gmra.mrb[0].mxu0 %v478
        %v760 = vpop.f32.mrb[0].mxu0
        %v761 = vadd.f32 0.0, %v760
        %v762 = vpop.f32.mrb[0].mxu0
        %v763 = vadd.f32 0.0, %v762
        %764 = vmatprep.mubr.f32.mxu0 %v481
        %765 = vmatmul.mubr.f32.gmra.mrb[0].mxu0 %v480
        %v766 = vpop.f32.mrb[0].mxu0
        %v767 = vadd.f32 0.0, %v766
        %v768 = vpop.f32.mrb[0].mxu0
        %v769 = vadd.f32 0.0, %v768
        %770 = vmatprep.mubr.f32.mxu0 %v483
        %771 = vmatmul.mubr.f32.gmra.mrb[0].mxu0 %v482
        %v772 = vpop.f32.mrb[0].mxu0
        %v773 = vadd.f32 0.0, %v772
        %v774 = vpop.f32.mrb[0].mxu0
        %v775 = vadd.f32 0.0, %v774
        %776 = vmatprep.mubr.f32.mxu0 %v485
        %777 = vmatmul.mubr.f32.gmra.mrb[0].mxu0 %v484
        %v778 = vpop.f32.mrb[0].mxu0
        %v779 = vadd.f32 0.0, %v778
        %v780 = vpop.f32.mrb[0].mxu0
        %v781 = vadd.f32 0.0, %v780
        %782 = vmatprep.mubr.f32.mxu0 %v487
        %783 = vmatmul.mubr.f32.gmra.mrb[0].mxu0 %v486
        %v784 = vpop.f32.mrb[0].mxu0
        %v785 = vadd.f32 0.0, %v784
        %v786 = vpop.f32.mrb[0].mxu0
        %v787 = vadd.f32 0.0, %v786
        %788 = vmatprep.mubr.f32.mxu0 %v489
        %789 = vmatmul.mubr.f32.gmra.mrb[0].mxu0 %v488
        %v790 = vpop.f32.mrb[0].mxu0
        %v791 = vadd.f32 0.0, %v790
        %v792 = vpop.f32.mrb[0].mxu0
        %v793 = vadd.f32 0.0, %v792
        %794 = vmatprep.mubr.f32.mxu0 %v491
        %795 = vmatmul.mubr.f32.gmra.mrb[0].mxu0 %v490
        %v796 = vpop.f32.mrb[0].mxu0
        %v797 = vadd.f32 0.0, %v796
        %v798 = vpop.f32.mrb[0].mxu0
        %v799 = vadd.f32 0.0, %v798
        %800 = vmatprep.mubr.f32.mxu0 %v493
        %801 = vmatmul.mubr.f32.gmra.mrb[0].mxu0 %v492
        %v802 = vpop.f32.mrb[0].mxu0
        %v803 = vadd.f32 0.0, %v802
        %v804 = vpop.f32.mrb[0].mxu0
        %v805 = vadd.f32 0.0, %v804
        %806 = vmatprep.mubr.f32.mxu0 %v495
        %807 = vmatmul.mubr.f32.gmra.mrb[0].mxu0 %v494
        %v808 = vpop.f32.mrb[0].mxu0
        %v809 = vadd.f32 0.0, %v808
        %v810 = vpop.f32.mrb[0].mxu0
        %v811 = vadd.f32 0.0, %v810
        %812 = vmatprep.mubr.f32.mxu0 %v497
        %813 = vmatmul.mubr.f32.gmra.mrb[0].mxu0 %v496
        %v814 = vpop.f32.mrb[0].mxu0
        %v815 = vadd.f32 0.0, %v814
        %v816 = vpop.f32.mrb[0].mxu0
        %v817 = vadd.f32 0.0, %v816
        %818 = vdwg.mxu0
        %v819 = vadd.f32 %v370, %v629
        %v820 = vadd.f32 %v371, %v631
        %v821 = vadd.f32 %v372, %v635
        %v822 = vadd.f32 %v373, %v637
        %v823 = vadd.f32 %v374, %v641
        %v824 = vadd.f32 %v375, %v643
        %v825 = vadd.f32 %v376, %v647
        %v826 = vadd.f32 %v377, %v649
        %v827 = vadd.f32 %v378, %v653
        %v828 = vadd.f32 %v379, %v655
        %v829 = vadd.f32 %v380, %v659
        %v830 = vadd.f32 %v381, %v661
        %v831 = vadd.f32 %v382, %v665
        %v832 = vadd.f32 %v383, %v667
        %v833 = vadd.f32 %v384, %v671
        %v834 = vadd.f32 %v385, %v673
        %v835 = vadd.f32 %v386, %v677
        %v836 = vadd.f32 %v387, %v679
        %v837 = vadd.f32 %v388, %v683
        %v838 = vadd.f32 %v389, %v685
        %v839 = vadd.f32 %v390, %v689
        %v840 = vadd.f32 %v391, %v691
        %v841 = vadd.f32 %v392, %v695
        %v842 = vadd.f32 %v393, %v697
        %v843 = vadd.f32 %v394, %v701
        %v844 = vadd.f32 %v395, %v703
        %v845 = vadd.f32 %v396, %v707
        %v846 = vadd.f32 %v397, %v709
        %v847 = vadd.f32 %v398, %v713
        %v848 = vadd.f32 %v399, %v715
        %v849 = vadd.f32 %v400, %v719
        %v850 = vadd.f32 %v401, %v721
        %v851 = vadd.f32 %v402, %v725
        %v852 = vadd.f32 %v403, %v727
        %v853 = vadd.f32 %v404, %v731
        %v854 = vadd.f32 %v405, %v733
        %v855 = vadd.f32 %v406, %v737
        %v856 = vadd.f32 %v407, %v739
        %v857 = vadd.f32 %v408, %v743
        %v858 = vadd.f32 %v409, %v745
        %v859 = vadd.f32 %v410, %v749
        %v860 = vadd.f32 %v411, %v751
        %v861 = vadd.f32 %v412, %v755
        %v862 = vadd.f32 %v413, %v757
        %v863 = vadd.f32 %v414, %v761
        %v864 = vadd.f32 %v415, %v763
        %v865 = vadd.f32 %v416, %v767
        %v866 = vadd.f32 %v417, %v769
        %v867 = vadd.f32 %v418, %v773
        %v868 = vadd.f32 %v419, %v775
        %v869 = vadd.f32 %v420, %v779
        %v870 = vadd.f32 %v421, %v781
        %v871 = vadd.f32 %v422, %v785
        %v872 = vadd.f32 %v423, %v787
        %v873 = vadd.f32 %v424, %v791
        %v874 = vadd.f32 %v425, %v793
        %v875 = vadd.f32 %v426, %v797
        %v876 = vadd.f32 %v427, %v799
        %v877 = vadd.f32 %v428, %v803
        %v878 = vadd.f32 %v429, %v805
        %v879 = vadd.f32 %v430, %v809
        %v880 = vadd.f32 %v431, %v811
        %v881 = vadd.f32 %v432, %v815
        %v882 = vadd.f32 %v433, %v817
        %883 = vst [vmem:[#allocation2] sm:$0xff] %v819
        %884 = vst [vmem:[#allocation2 + $0x8] sm:$0xff] %v820
        %885 = vst [vmem:[#allocation2 + $0x10] sm:$0xff] %v821
        %886 = vst [vmem:[#allocation2 + $0x18] sm:$0xff] %v822
        %887 = vst [vmem:[#allocation2 + $0x20] sm:$0xff] %v823
        %888 = vst [vmem:[#allocation2 + $0x28] sm:$0xff] %v824
        %889 = vst [vmem:[#allocation2 + $0x30] sm:$0xff] %v825
        %890 = vst [vmem:[#allocation2 + $0x38] sm:$0xff] %v826
        %891 = vst [vmem:[#allocation2 + $0x40] sm:$0xff] %v827
        %892 = vst [vmem:[#allocation2 + $0x48] sm:$0xff] %v828
        %893 = vst [vmem:[#allocation2 + $0x50] sm:$0xff] %v829
        %894 = vst [vmem:[#allocation2 + $0x58] sm:$0xff] %v830
        %895 = vst [vmem:[#allocation2 + $0x60] sm:$0xff] %v831
        %896 = vst [vmem:[#allocation2 + $0x68] sm:$0xff] %v832
        %897 = vst [vmem:[#allocation2 + $0x70] sm:$0xff] %v833
        %898 = vst [vmem:[#allocation2 + $0x78] sm:$0xff] %v834
        %899 = vst [vmem:[#allocation2 + $0x80] sm:$0xff] %v835
        %900 = vst [vmem:[#allocation2 + $0x88] sm:$0xff] %v836
        %901 = vst [vmem:[#allocation2 + $0x90] sm:$0xff] %v837
        %902 = vst [vmem:[#allocation2 + $0x98] sm:$0xff] %v838
        %903 = vst [vmem:[#allocation2 + $0xa0] sm:$0xff] %v839
        %904 = vst [vmem:[#allocation2 + $0xa8] sm:$0xff] %v840
        %905 = vst [vmem:[#allocation2 + $0xb0] sm:$0xff] %v841
        %906 = vst [vmem:[#allocation2 + $0xb8] sm:$0xff] %v842
        %907 = vst [vmem:[#allocation2 + $0xc0] sm:$0xff] %v843
        %908 = vst [vmem:[#allocation2 + $0xc8] sm:$0xff] %v844
        %909 = vst [vmem:[#allocation2 + $0xd0] sm:$0xff] %v845
        %910 = vst [vmem:[#allocation2 + $0xd8] sm:$0xff] %v846
        %911 = vst [vmem:[#allocation2 + $0xe0] sm:$0xff] %v847
        %912 = vst [vmem:[#allocation2 + $0xe8] sm:$0xff] %v848
        %913 = vst [vmem:[#allocation2 + $0xf0] sm:$0xff] %v849
        %914 = vst [vmem:[#allocation2 + $0xf8] sm:$0xff] %v850
        %915 = vst [vmem:[#allocation2 + $0x100] sm:$0xff] %v851
        %916 = vst [vmem:[#allocation2 + $0x108] sm:$0xff] %v852
        %917 = vst [vmem:[#allocation2 + $0x110] sm:$0xff] %v853
        %918 = vst [vmem:[#allocation2 + $0x118] sm:$0xff] %v854
        %919 = vst [vmem:[#allocation2 + $0x120] sm:$0xff] %v855
        %920 = vst [vmem:[#allocation2 + $0x128] sm:$0xff] %v856
        %921 = vst [vmem:[#allocation2 + $0x130] sm:$0xff] %v857
        %922 = vst [vmem:[#allocation2 + $0x138] sm:$0xff] %v858
        %923 = vst [vmem:[#allocation2 + $0x140] sm:$0xff] %v859
        %924 = vst [vmem:[#allocation2 + $0x148] sm:$0xff] %v860
        %925 = vst [vmem:[#allocation2 + $0x150] sm:$0xff] %v861
        %926 = vst [vmem:[#allocation2 + $0x158] sm:$0xff] %v862
        %927 = vst [vmem:[#allocation2 + $0x160] sm:$0xff] %v863
        %928 = vst [vmem:[#allocation2 + $0x168] sm:$0xff] %v864
        %929 = vst [vmem:[#allocation2 + $0x170] sm:$0xff] %v865
        %930 = vst [vmem:[#allocation2 + $0x178] sm:$0xff] %v866
        %931 = vst [vmem:[#allocation2 + $0x180] sm:$0xff] %v867
        %932 = vst [vmem:[#allocation2 + $0x188] sm:$0xff] %v868
        %933 = vst [vmem:[#allocation2 + $0x190] sm:$0xff] %v869
        %934 = vst [vmem:[#allocation2 + $0x198] sm:$0xff] %v870
        %935 = vst [vmem:[#allocation2 + $0x1a0] sm:$0xff] %v871
        %936 = vst [vmem:[#allocation2 + $0x1a8] sm:$0xff] %v872
        %937 = vst [vmem:[#allocation2 + $0x1b0] sm:$0xff] %v873
        %938 = vst [vmem:[#allocation2 + $0x1b8] sm:$0xff] %v874
        %939 = vst [vmem:[#allocation2 + $0x1c0] sm:$0xff] %v875
        %940 = vst [vmem:[#allocation2 + $0x1c8] sm:$0xff] %v876
        %941 = vst [vmem:[#allocation2 + $0x1d0] sm:$0xff] %v877
        %942 = vst [vmem:[#allocation2 + $0x1d8] sm:$0xff] %v878
        %943 = vst [vmem:[#allocation2 + $0x1e0] sm:$0xff] %v879
        %944 = vst [vmem:[#allocation2 + $0x1e8] sm:$0xff] %v880
        %945 = vst [vmem:[#allocation2 + $0x1f0] sm:$0xff] %v881
        %946 = vst [vmem:[#allocation2 + $0x1f8] sm:$0xff] %v882
        // Predicated region
        $region49: #{tpu_custom_call.1} parent=31 // pred_check
          %p947 = pneg %p302
        $region50: #{tpu_custom_call.1} parent=31 // pred_check_branch
          %949 = sbr.rel (%p947) target = $region52
        $region51: #{tpu_custom_call.1} parent=31 // pred_region
          %v950 = vld [vmem:[#allocation2] sm:$0xff]
          %v951 = vld [vmem:[#allocation2 + $0x8] sm:$0xff]
          %v952 = vld [vmem:[#allocation2 + $0x10] sm:$0xff]
          %v953 = vld [vmem:[#allocation2 + $0x18] sm:$0xff]
          %v954 = vld [vmem:[#allocation2 + $0x20] sm:$0xff]
          %v955 = vld [vmem:[#allocation2 + $0x28] sm:$0xff]
          %v956 = vld [vmem:[#allocation2 + $0x30] sm:$0xff]
          %v957 = vld [vmem:[#allocation2 + $0x38] sm:$0xff]
          %v958 = vld [vmem:[#allocation2 + $0x40] sm:$0xff]
          %v959 = vld [vmem:[#allocation2 + $0x48] sm:$0xff]
          %v960 = vld [vmem:[#allocation2 + $0x50] sm:$0xff]
          %v961 = vld [vmem:[#allocation2 + $0x58] sm:$0xff]
          %v962 = vld [vmem:[#allocation2 + $0x60] sm:$0xff]
          %v963 = vld [vmem:[#allocation2 + $0x68] sm:$0xff]
          %v964 = vld [vmem:[#allocation2 + $0x70] sm:$0xff]
          %v965 = vld [vmem:[#allocation2 + $0x78] sm:$0xff]
          %v966 = vld [vmem:[#allocation2 + $0x80] sm:$0xff]
          %v967 = vld [vmem:[#allocation2 + $0x88] sm:$0xff]
          %v968 = vld [vmem:[#allocation2 + $0x90] sm:$0xff]
          %v969 = vld [vmem:[#allocation2 + $0x98] sm:$0xff]
          %v970 = vld [vmem:[#allocation2 + $0xa0] sm:$0xff]
          %v971 = vld [vmem:[#allocation2 + $0xa8] sm:$0xff]
          %v972 = vld [vmem:[#allocation2 + $0xb0] sm:$0xff]
          %v973 = vld [vmem:[#allocation2 + $0xb8] sm:$0xff]
          %v974 = vld [vmem:[#allocation2 + $0xc0] sm:$0xff]
          %v975 = vld [vmem:[#allocation2 + $0xc8] sm:$0xff]
          %v976 = vld [vmem:[#allocation2 + $0xd0] sm:$0xff]
          %v977 = vld [vmem:[#allocation2 + $0xd8] sm:$0xff]
          %v978 = vld [vmem:[#allocation2 + $0xe0] sm:$0xff]
          %v979 = vld [vmem:[#allocation2 + $0xe8] sm:$0xff]
          %v980 = vld [vmem:[#allocation2 + $0xf0] sm:$0xff]
          %v981 = vld [vmem:[#allocation2 + $0xf8] sm:$0xff]
          %v982 = vld [vmem:[#allocation2 + $0x100] sm:$0xff]
          %v983 = vld [vmem:[#allocation2 + $0x108] sm:$0xff]
          %v984 = vld [vmem:[#allocation2 + $0x110] sm:$0xff]
          %v985 = vld [vmem:[#allocation2 + $0x118] sm:$0xff]
          %v986 = vld [vmem:[#allocation2 + $0x120] sm:$0xff]
          %v987 = vld [vmem:[#allocation2 + $0x128] sm:$0xff]
          %v988 = vld [vmem:[#allocation2 + $0x130] sm:$0xff]
          %v989 = vld [vmem:[#allocation2 + $0x138] sm:$0xff]
          %v990 = vld [vmem:[#allocation2 + $0x140] sm:$0xff]
          %v991 = vld [vmem:[#allocation2 + $0x148] sm:$0xff]
          %v992 = vld [vmem:[#allocation2 + $0x150] sm:$0xff]
          %v993 = vld [vmem:[#allocation2 + $0x158] sm:$0xff]
          %v994 = vld [vmem:[#allocation2 + $0x160] sm:$0xff]
          %v995 = vld [vmem:[#allocation2 + $0x168] sm:$0xff]
          %v996 = vld [vmem:[#allocation2 + $0x170] sm:$0xff]
          %v997 = vld [vmem:[#allocation2 + $0x178] sm:$0xff]
          %v998 = vld [vmem:[#allocation2 + $0x180] sm:$0xff]
          %v999 = vld [vmem:[#allocation2 + $0x188] sm:$0xff]
          %v1000 = vld [vmem:[#allocation2 + $0x190] sm:$0xff]
          %v1001 = vld [vmem:[#allocation2 + $0x198] sm:$0xff]
          %v1002 = vld [vmem:[#allocation2 + $0x1a0] sm:$0xff]
          %v1003 = vld [vmem:[#allocation2 + $0x1a8] sm:$0xff]
          %v1004 = vld [vmem:[#allocation2 + $0x1b0] sm:$0xff]
          %v1005 = vld [vmem:[#allocation2 + $0x1b8] sm:$0xff]
          %v1006 = vld [vmem:[#allocation2 + $0x1c0] sm:$0xff]
          %v1007 = vld [vmem:[#allocation2 + $0x1c8] sm:$0xff]
          %v1008 = vld [vmem:[#allocation2 + $0x1d0] sm:$0xff]
          %v1009 = vld [vmem:[#allocation2 + $0x1d8] sm:$0xff]
          %v1010 = vld [vmem:[#allocation2 + $0x1e0] sm:$0xff]
          %v1011 = vld [vmem:[#allocation2 + $0x1e8] sm:$0xff]
          %v1012 = vld [vmem:[#allocation2 + $0x1f0] sm:$0xff]
          %v1013 = vld [vmem:[#allocation2 + $0x1f8] sm:$0xff]
          %v1014 = vld [vmem:[%s262] sm:$0x3]
          %v1016 = vlaneseq
          %v1017 = vshrl.u32 %v1016, 7
          %v1018 = vsub.s32 0, %v1017
          %v1019 = vrot.slane %v1014, %v1018
          %v1020 = vlaneseq
          %v1021 = vshrl.u32 %v1020, 7
          %v1022 = vsub.s32 1, %v1021
          %v1023 = vrot.slane %v1014, %v1022
          %v1026 = vadd.f32 %v950, %v1019
          %v1027 = vadd.f32 %v951, %v1023
          %v1028 = vadd.f32 %v952, %v1019
          %v1029 = vadd.f32 %v953, %v1023
          %v1030 = vadd.f32 %v954, %v1019
          %v1031 = vadd.f32 %v955, %v1023
          %v1032 = vadd.f32 %v956, %v1019
          %v1033 = vadd.f32 %v957, %v1023
          %v1034 = vadd.f32 %v958, %v1019
          %v1035 = vadd.f32 %v959, %v1023
          %v1036 = vadd.f32 %v960, %v1019
          %v1037 = vadd.f32 %v961, %v1023
          %v1038 = vadd.f32 %v962, %v1019
          %v1039 = vadd.f32 %v963, %v1023
          %v1040 = vadd.f32 %v964, %v1019
          %v1041 = vadd.f32 %v965, %v1023
          %v1042 = vadd.f32 %v966, %v1019
          %v1043 = vadd.f32 %v967, %v1023
          %v1044 = vadd.f32 %v968, %v1019
          %v1045 = vadd.f32 %v969, %v1023
          %v1046 = vadd.f32 %v970, %v1019
          %v1047 = vadd.f32 %v971, %v1023
          %v1048 = vadd.f32 %v972, %v1019
          %v1049 = vadd.f32 %v973, %v1023
          %v1050 = vadd.f32 %v974, %v1019
          %v1051 = vadd.f32 %v975, %v1023
          %v1052 = vadd.f32 %v976, %v1019
          %v1053 = vadd.f32 %v977, %v1023
          %v1054 = vadd.f32 %v978, %v1019
          %v1055 = vadd.f32 %v979, %v1023
          %v1056 = vadd.f32 %v980, %v1019
          %v1057 = vadd.f32 %v981, %v1023
          %v1058 = vadd.f32 %v982, %v1019
          %v1059 = vadd.f32 %v983, %v1023
          %v1060 = vadd.f32 %v984, %v1019
          %v1061 = vadd.f32 %v985, %v1023
          %v1062 = vadd.f32 %v986, %v1019
          %v1063 = vadd.f32 %v987, %v1023
          %v1064 = vadd.f32 %v988, %v1019
          %v1065 = vadd.f32 %v989, %v1023
          %v1066 = vadd.f32 %v990, %v1019
          %v1067 = vadd.f32 %v991, %v1023
          %v1068 = vadd.f32 %v992, %v1019
          %v1069 = vadd.f32 %v993, %v1023
          %v1070 = vadd.f32 %v994, %v1019
          %v1071 = vadd.f32 %v995, %v1023
          %v1072 = vadd.f32 %v996, %v1019
          %v1073 = vadd.f32 %v997, %v1023
          %v1074 = vadd.f32 %v998, %v1019
          %v1075 = vadd.f32 %v999, %v1023
          %v1076 = vadd.f32 %v1000, %v1019
          %v1077 = vadd.f32 %v1001, %v1023
          %v1078 = vadd.f32 %v1002, %v1019
          %v1079 = vadd.f32 %v1003, %v1023
          %v1080 = vadd.f32 %v1004, %v1019
          %v1081 = vadd.f32 %v1005, %v1023
          %v1082 = vadd.f32 %v1006, %v1019
          %v1083 = vadd.f32 %v1007, %v1023
          %v1084 = vadd.f32 %v1008, %v1019
          %v1085 = vadd.f32 %v1009, %v1023
          %v1086 = vadd.f32 %v1010, %v1019
          %v1087 = vadd.f32 %v1011, %v1023
          %v1088 = vadd.f32 %v1012, %v1019
          %v1089 = vadd.f32 %v1013, %v1023
          %1090 = vst [vmem:[%s294] sm:$0xff] %v1026
          %1091 = vst [vmem:[%s294 + $0x8] sm:$0xff] %v1027
          %1092 = vst [vmem:[%s294 + $0x10] sm:$0xff] %v1028
          %1093 = vst [vmem:[%s294 + $0x18] sm:$0xff] %v1029
          %1094 = vst [vmem:[%s294 + $0x20] sm:$0xff] %v1030
          %1095 = vst [vmem:[%s294 + $0x28] sm:$0xff] %v1031
          %1096 = vst [vmem:[%s294 + $0x30] sm:$0xff] %v1032
          %1097 = vst [vmem:[%s294 + $0x38] sm:$0xff] %v1033
          %1098 = vst [vmem:[%s294 + $0x40] sm:$0xff] %v1034
          %1099 = vst [vmem:[%s294 + $0x48] sm:$0xff] %v1035
          %1100 = vst [vmem:[%s294 + $0x50] sm:$0xff] %v1036
          %1101 = vst [vmem:[%s294 + $0x58] sm:$0xff] %v1037
          %1102 = vst [vmem:[%s294 + $0x60] sm:$0xff] %v1038
          %1103 = vst [vmem:[%s294 + $0x68] sm:$0xff] %v1039
          %1104 = vst [vmem:[%s294 + $0x70] sm:$0xff] %v1040
          %1105 = vst [vmem:[%s294 + $0x78] sm:$0xff] %v1041
          %1106 = vst [vmem:[%s294 + $0x80] sm:$0xff] %v1042
          %1107 = vst [vmem:[%s294 + $0x88] sm:$0xff] %v1043
          %1108 = vst [vmem:[%s294 + $0x90] sm:$0xff] %v1044
          %1109 = vst [vmem:[%s294 + $0x98] sm:$0xff] %v1045
          %1110 = vst [vmem:[%s294 + $0xa0] sm:$0xff] %v1046
          %1111 = vst [vmem:[%s294 + $0xa8] sm:$0xff] %v1047
          %1112 = vst [vmem:[%s294 + $0xb0] sm:$0xff] %v1048
          %1113 = vst [vmem:[%s294 + $0xb8] sm:$0xff] %v1049
          %1114 = vst [vmem:[%s294 + $0xc0] sm:$0xff] %v1050
          %1115 = vst [vmem:[%s294 + $0xc8] sm:$0xff] %v1051
          %1116 = vst [vmem:[%s294 + $0xd0] sm:$0xff] %v1052
          %1117 = vst [vmem:[%s294 + $0xd8] sm:$0xff] %v1053
          %1118 = vst [vmem:[%s294 + $0xe0] sm:$0xff] %v1054
          %1119 = vst [vmem:[%s294 + $0xe8] sm:$0xff] %v1055
          %1120 = vst [vmem:[%s294 + $0xf0] sm:$0xff] %v1056
          %1121 = vst [vmem:[%s294 + $0xf8] sm:$0xff] %v1057
          %1122 = vst [vmem:[%s294 + $0x100] sm:$0xff] %v1058
          %1123 = vst [vmem:[%s294 + $0x108] sm:$0xff] %v1059
          %1124 = vst [vmem:[%s294 + $0x110] sm:$0xff] %v1060
          %1125 = vst [vmem:[%s294 + $0x118] sm:$0xff] %v1061
          %1126 = vst [vmem:[%s294 + $0x120] sm:$0xff] %v1062
          %1127 = vst [vmem:[%s294 + $0x128] sm:$0xff] %v1063
          %1128 = vst [vmem:[%s294 + $0x130] sm:$0xff] %v1064
          %1129 = vst [vmem:[%s294 + $0x138] sm:$0xff] %v1065
          %1130 = vst [vmem:[%s294 + $0x140] sm:$0xff] %v1066
          %1131 = vst [vmem:[%s294 + $0x148] sm:$0xff] %v1067
          %1132 = vst [vmem:[%s294 + $0x150] sm:$0xff] %v1068
          %1133 = vst [vmem:[%s294 + $0x158] sm:$0xff] %v1069
          %1134 = vst [vmem:[%s294 + $0x160] sm:$0xff] %v1070
          %1135 = vst [vmem:[%s294 + $0x168] sm:$0xff] %v1071
          %1136 = vst [vmem:[%s294 + $0x170] sm:$0xff] %v1072
          %1137 = vst [vmem:[%s294 + $0x178] sm:$0xff] %v1073
          %1138 = vst [vmem:[%s294 + $0x180] sm:$0xff] %v1074
          %1139 = vst [vmem:[%s294 + $0x188] sm:$0xff] %v1075
          %1140 = vst [vmem:[%s294 + $0x190] sm:$0xff] %v1076
          %1141 = vst [vmem:[%s294 + $0x198] sm:$0xff] %v1077
          %1142 = vst [vmem:[%s294 + $0x1a0] sm:$0xff] %v1078
          %1143 = vst [vmem:[%s294 + $0x1a8] sm:$0xff] %v1079
          %1144 = vst [vmem:[%s294 + $0x1b0] sm:$0xff] %v1080
          %1145 = vst [vmem:[%s294 + $0x1b8] sm:$0xff] %v1081
          %1146 = vst [vmem:[%s294 + $0x1c0] sm:$0xff] %v1082
          %1147 = vst [vmem:[%s294 + $0x1c8] sm:$0xff] %v1083
          %1148 = vst [vmem:[%s294 + $0x1d0] sm:$0xff] %v1084
          %1149 = vst [vmem:[%s294 + $0x1d8] sm:$0xff] %v1085
          %1150 = vst [vmem:[%s294 + $0x1e0] sm:$0xff] %v1086
          %1151 = vst [vmem:[%s294 + $0x1e8] sm:$0xff] %v1087
          %1152 = vst [vmem:[%s294 + $0x1f0] sm:$0xff] %v1088
          %1153 = vst [vmem:[%s294 + $0x1f8] sm:$0xff] %v1089
        $region52: #{tpu_custom_call.1} parent=31 // pred_fallthru
          _
        %s1154 = sand.u32 %s134, 1
        %s1155 = scalar_lea.sflag [#allocation5], %s1154
        %s1156 = sand.u32 %s134, 1
        %s1157 = smul.addr %s1156, 512
        %s1158 = scalar_lea.vmem [#allocation9], %s1157
        // Predicated region
        $region53: #{tpu_custom_call.1} parent=31 // pred_check
          %p1159 = pneg %p144
        $region54: #{tpu_custom_call.1} parent=31 // pred_check_branch
          %1161 = sbr.rel (%p1159) target = $region56
        $region55: #{tpu_custom_call.1} parent=31 // pred_region
          %s1162 = smul.u32 32, %s28
          %s1163 = smul.u32 2, %s29
          %s1165 = ssub.s32 8192, 8192
          %1166 = vsyncadd %s1155, %s1165
          %s1167 = smul.addr %s1162, 6
          %s1168 = sadd.s32 %s1163, %s1167
          %s1169 = smul.addr %s1168, 128
          %s1170 = scalar_lea.hbm %s3, %s1169
          %s1171 = sshll.u32 %s1158, 4
          %s1172 = int_to_ptr.vmem [resolvable:$true] %s1171
          %1177 = dma.vmem_to_hbm [thread:$0]  %s1172, 8192, %s1170, %s1155, 256, 768, 16
        $region56: #{tpu_custom_call.1} parent=31 // pred_fallthru
          _
      $region32: #{tpu_custom_call.1} parent=5 // pred_fallthru
        _
      %p1178 = scmp.le.s32.totalorder 2, %s18
      // Predicated region
      $region57: #{tpu_custom_call.1} parent=5 // pred_check
        %p1179 = pneg %p1178
      $region58: #{tpu_custom_call.1} parent=5 // pred_check_branch
        %1181 = sbr.rel (%p1179) target = $region60
      $region59: #{tpu_custom_call.1} parent=5 // pred_region
        %s1182 = ssub.s32 %s18, 2
        // Predicated region
        $region61: #{tpu_custom_call.1} parent=59 // pred_check
          %p1183 = pneg %p150
        $region62: #{tpu_custom_call.1} parent=59 // pred_check_branch
          %1185 = sbr.rel (%p1183) target = $region64
        $region63: #{tpu_custom_call.1} parent=59 // pred_region
          %s1186 = sand.u32 %s135, 1
          %s1187 = scalar_lea.sflag [#allocation5], %s1186
          %s1188 = sand.u32 %s135, 1
          %s1189 = smul.addr %s1188, 512
          %s1190 = scalar_lea.vmem [#allocation9], %s1189
          %1191 = dma.done %s1187, 8192
        $region64: #{tpu_custom_call.1} parent=59 // pred_fallthru
          _
      $region60: #{tpu_custom_call.1} parent=5 // pred_fallthru
        _
    $region6: #{tpu_custom_call.1} parent=1 // loop_footer
      %s22 = sadd.s32 1, %s18
    $region7: #{tpu_custom_call.1} parent=1 // loop_footer_branch
      %17 = sbr.rel target = $region3
    $region8: #{tpu_custom_call.1} parent=1 // loop_exit
      _
    %1192 = vsyncpa [#allocation4], 1
    %s1193 = scalar_lea.sflag [#allocation4], 1
    %1194 = vsyncpa %s1193, 1
    %1195 = vsyncpa [#allocation7], 1
    %s1196 = scalar_lea.sflag [#allocation7], 1
    %1197 = vsyncpa %s1196, 1
    %1198 = vsyncpa [#allocation5], 1
    %s1199 = scalar_lea.sflag [#allocation5], 1
    %1200 = vsyncpa %s1199, 1

</llo_original>
